<compile_context>
chip_gen: v7x
topology: tpu7x:2x2x1
jax: 0.10.0
libtpu: 0.0.40
codegen_flags: <defaults>
</compile_context>

<pallas_src>
import functools

import numpy as np
import jax
import jax.numpy as jnp
from jax import lax
from jax.experimental import pallas as pl
from jax.experimental.pallas import tpu as pltpu


# ----------------------------------------------------------------------------
# Deterministic parameter construction (mirrors RingAttractorLayer.__init__)
# ----------------------------------------------------------------------------
def _create_RA_connectivity_matrix_hidden(size, strength, lambda_decay):
    m = np.zeros((size, size))
    for i in range(size):
        for j in range(size):
            d = min(abs(i - j), size - abs(i - j))
            m[i, j] = strength * np.exp(-d / lambda_decay)
    return m


def _create_RA_connectivity_matrix(input_size, output_size, strength, lambda_decay):
    m = np.zeros((output_size, input_size))
    ratio = int(input_size / output_size)
    for i in range(output_size):
        for j in range(input_size):
            d = min(abs(i - int(j / ratio)), output_size - abs(i - int(j / ratio)))
            m[i, j] = strength * np.exp(-d / lambda_decay)
    return m


def _add_no_action_centered_neuron(arr, ratio, inhib_strength):
    inhib_row = np.full((1, arr.shape[1]), inhib_strength)
    arr = np.vstack([inhib_row, arr])
    inhib_col = np.full((arr.shape[0], ratio), inhib_strength)
    arr = np.hstack([inhib_col, arr])
    return arr


def make_ring_attractor_params(input_size, num_neurons,
                               connectivity_strength=0.1, tau=10.0, beta=10.0,
                               lambda_decay=0.9):
    w_ih = _create_RA_connectivity_matrix(
        input_size - (num_neurons - 1), num_neurons - 1,
        connectivity_strength, lambda_decay)
    w_hh = _create_RA_connectivity_matrix_hidden(
        num_neurons - 1, connectivity_strength, lambda_decay)
    w_ih = _add_no_action_centered_neuron(
        w_ih, int(input_size / num_neurons), connectivity_strength)
    w_hh = _add_no_action_centered_neuron(w_hh, 1, connectivity_strength)
    assert w_ih.shape == (num_neurons, input_size), w_ih.shape
    assert w_hh.shape == (num_neurons, num_neurons), w_hh.shape
    return (jnp.asarray(w_ih, jnp.float32),
            jnp.asarray(w_hh, jnp.float32),
            float(tau), float(beta))


def prepare_kernel_params(w_ih, w_hh, tau):
    """One-time prep: fold 1/tau into W_ih.

    Weights stay in their native (H, D) / (H, H) orientation because the kernel
    keeps batch in the lane axis (h stored as (H, bt)), so the recurrence reads
    W_hh @ h and the projection reads (W_ih/tau) @ x_t (no transposes needed).
    """
    wih_scaled = jnp.asarray(w_ih, jnp.float32) / jnp.float32(tau)    # (H, D)
    whh = jnp.asarray(w_hh, jnp.float32)                              # (H, H)
    # TODO(synk): on v6e/v7x, casting x and both weights to bf16 for the MXU dots
    # (f32 accumulate / elementwise) would halve x DMA & VMEM; kept f32 for parity.
    return wih_scaled, whh


# ----------------------------------------------------------------------------
# Pallas kernel: hoisted lane-dense projection + chunked serial recurrence
# ----------------------------------------------------------------------------
def _ring_attractor_kernel(x_ref, wih_ref, whh_ref, out_ref, u_ref,
                           *, beta, n_chunks):
    # x_ref:   (T, D, bt)  VMEM, batch in the 128-lane axis
    # wih_ref: (H, D)      VMEM, resident across grid steps (1/tau pre-folded)
    # whh_ref: (H, H)      VMEM, resident across grid steps
    # out_ref: (T, H, bt)  VMEM, each out_ref[t] store is a lane-dense tile
    # u_ref:   (T, H, bt)  VMEM scratch holding the hoisted input projection
    T, _, bt = x_ref.shape
    H = whh_ref.shape[0]
    csz = bt // n_chunks

    wih = wih_ref[...]
    whh = whh_ref[...]

    unroll = True if T <= 32 else 8

    # Phase 1: hoisted input projection (non-recurrent, pipelined MXU work).
    # Written once into a leading-time VMEM scratch so the recurrence reads it
    # with a plain address bump instead of dynamically slicing a live value.
    def proj_body(t, carry):
        u_ref[t] = jnp.dot(wih, x_ref[t], preferred_element_type=jnp.float32)
        return carry

    lax.fori_loop(0, T, proj_body, 0, unroll=unroll)

    # Phase 2: serial recurrence.  Independent batch-lane sub-chunks interleave
    # their matmul -> add -> tanh chains to hide MXU/EUP latency per step.
    def step(t, hs):
        u_t = u_ref[t]                                   # (H, bt) leading-axis load
        new_hs = []
        for c in range(n_chunks):
            u_c = u_t[:, c * csz:(c + 1) * csz]          # static vreg-aligned slice
            h_c = jnp.tanh(u_c + jnp.dot(whh, hs[c],
                                         preferred_element_type=jnp.float32))
            new_hs.append(h_c)
        full = new_hs[0] if n_chunks == 1 else jnp.concatenate(new_hs, axis=1)
        out_ref[t] = beta * full                         # single lane-dense store
        return tuple(new_hs)

    h0 = tuple(jnp.zeros((H, csz), jnp.float32) for _ in range(n_chunks))
    lax.fori_loop(0, T, step, h0, unroll=unroll)


# ----------------------------------------------------------------------------
# Wrapper: tiling, VMEM sizing, layout plumbing
# ----------------------------------------------------------------------------
def _round_up(n, m):
    return ((n + m - 1) // m) * m


def _pick_batch_tile(B, batch_tile):
    """Batch is the lane axis: tiles must be a multiple of 128 or the full B."""
    if B > batch_tile:
        return batch_tile
    # Whole batch fits in one tile: split into >=2 lane-dense tiles when possible
    # so the "parallel" grid axis can shard across both TensorCores (v7x megacore).
    if B >= 256 and B % 128 == 0:
        half = ((B // 2) // 128) * 128
        if half >= 128:
            return half
    return B


def _vmem_limit_bytes(T, D, H, bt):
    lane = _round_up(bt, 128)
    x_tile = T * _round_up(D, 8) * lane * 4
    hb_tile = T * _round_up(H, 8) * lane * 4            # out tile / u scratch
    w_tiles = _round_up(H, 8) * (_round_up(D, 128) + 128) * 4
    # BlockSpec double-buffers inputs and outputs; the u scratch is single-buffered.
    est = 2 * (x_tile + hb_tile + w_tiles) + hb_tile + (4 << 20)
    return int(min(max(est, 32 << 20), 100 << 20))


def ring_attractor_forward(x, wih_scaled, whh, beta, *, batch_tile=256):
    """x: (B, T, input_size) float32 -> (B, T, num_neurons) float32."""
    if x.dtype != jnp.float32:
        x = x.astype(jnp.float32)
    B, T, D = x.shape
    H = whh.shape[0]

    bt = _pick_batch_tile(B, batch_tile)
    grid = (pl.cdiv(B, bt),)
    n_chunks = 2 if (bt % 256 == 0) else 1

    # Lane-dense layout: batch occupies the 128-lane axis inside the kernel.
    # TODO(synk): this input transpose and the output transpose below each cost one
    # extra HBM pass; drop them if consumers can accept the kernel-native layouts.
    x_tdb = jnp.transpose(x, (1, 2, 0))                   # (T, D, B)

    kernel = functools.partial(_ring_attractor_kernel,
                               beta=float(beta), n_chunks=n_chunks)

    out_thb = pl.pallas_call(
        kernel,
        out_shape=jax.ShapeDtypeStruct((T, H, B), jnp.float32),
        grid=grid,
        in_specs=[
            pl.BlockSpec((T, D, bt), lambda b: (0, 0, b)),   # x batch-lane tile
            pl.BlockSpec((H, D), lambda b: (0, 0)),          # W_ih / tau (resident)
            pl.BlockSpec((H, H), lambda b: (0, 0)),          # W_hh       (resident)
        ],
        out_specs=pl.BlockSpec((T, H, bt), lambda b: (0, 0, b)),
        scratch_shapes=[pltpu.VMEM((T, H, bt), jnp.float32)],
        compiler_params=pltpu.CompilerParams(
            dimension_semantics=("parallel",),
            vmem_limit_bytes=_vmem_limit_bytes(T, D, H, bt)),
    )(x_tdb, wih_scaled, whh)

    # TODO(synk): for very long T, add a second "arbitrary" grid axis over T with h
    # carried in a VMEM scratch across T-blocks so VMEM stays bounded independent of T.
    return jnp.transpose(out_thb, (2, 0, 1))               # (B, T, H)


# ----------------------------------------------------------------------------
# Pure-JAX reference (mirrors PyTorch nn.RNN math) for correctness check
# ----------------------------------------------------------------------------
def ring_attractor_reference(x, w_ih, w_hh, tau, beta):
    x = x / tau
    B, T, _ = x.shape
    H = w_hh.shape[0]
    h = jnp.zeros((B, H), jnp.float32)
    outs = []
    for t in range(T):
        h = jnp.tanh(x[:, t, :] @ w_ih.T + h @ w_hh.T)
        outs.append(h)
    return beta * jnp.stack(outs, axis=1)


if __name__ == "__main__":
    # Shapes consistent with the module: int(input_size / num_neurons) == num_neurons - 1
    # so the connectivity construction yields an (H, D) matrix.
    num_neurons = 8                 # H (action-space size)
    input_size = 56                 # D = H * (H - 1)
    batch, seq = 2, 8

    w_ih, w_hh, tau, beta = make_ring_attractor_params(input_size, num_neurons)
    wih_scaled, whh = prepare_kernel_params(w_ih, w_hh, tau)

    key = jax.random.PRNGKey(0)
    x = jax.random.normal(key, (batch, seq, input_size), dtype=jnp.float32)

    out = jax.block_until_ready(ring_attractor_forward(x, wih_scaled, whh, beta))
    ref = ring_attractor_reference(x, w_ih, w_hh, tau, beta)
    assert out.shape == (batch, seq, num_neurons)
    assert jnp.allclose(out, ref, atol=1e-5, rtol=1e-5), float(jnp.abs(out - ref).max())

    # Multi-tile grid + in-kernel sub-chunk ILP (bt=256 -> 2 independent 128-lane chunks).
    x_big = jax.random.normal(jax.random.PRNGKey(1), (512, seq, input_size),
                              dtype=jnp.float32)
    out_big = jax.block_until_ready(
        ring_attractor_forward(x_big, wih_scaled, whh, beta))
    ref_big = ring_attractor_reference(x_big, w_ih, w_hh, tau, beta)
    assert jnp.allclose(out_big, ref_big, atol=1e-5, rtol=1e-5), \
        float(jnp.abs(out_big - ref_big).max())

    # Non-divisible batch: partial final lane tile is masked on store; verify no
    # garbage/NaN leaks into valid rows.
    x_odd = jax.random.normal(jax.random.PRNGKey(2), (300, seq, input_size),
                              dtype=jnp.float32)
    out_odd = jax.block_until_ready(
        ring_attractor_forward(x_odd, wih_scaled, whh, beta))
    ref_odd = ring_attractor_reference(x_odd, w_ih, w_hh, tau, beta)
    assert jnp.allclose(out_odd, ref_odd, atol=1e-5, rtol=1e-5), \
        float(jnp.abs(out_odd - ref_odd).max())
    assert bool(jnp.all(jnp.isfinite(out_odd)))

    print("KERNEL_OK")
</pallas_src>

<mosaic_0001>
module attributes {stable_mosaic.version = 11 : i64} {
  func.func @_ring_attractor_kernel(%arg0: i32, %arg1: memref<8x56x2xf32, #tpu.memory_space<vmem>>, %arg2: memref<8x56xf32, #tpu.memory_space<vmem>>, %arg3: memref<8x8xf32, #tpu.memory_space<vmem>>, %arg4: memref<8x8x2xf32, #tpu.memory_space<vmem>>, %arg5: memref<8x8x2xf32, #tpu.memory_space<vmem>>) attributes {dimension_semantics = [#tpu.dimension_semantics<parallel>], iteration_bounds = array<i64: 1>, scalar_prefetch = 0 : i64, scratch_operands = 1 : i64, tpu.core_type = #tpu.core_type<tc>, window_params = [{transform_indices = @transform_0, window_bounds = array<i64: 8, 56, 2>}, {pipeline_mode = #tpu.pipeline_mode<synchronous>, transform_indices = @transform_1, window_bounds = array<i64: 8, 56>}, {pipeline_mode = #tpu.pipeline_mode<synchronous>, transform_indices = @transform_2, window_bounds = array<i64: 8, 8>}, {transform_indices = @transform_3, window_bounds = array<i64: 8, 8, 2>}]} {
    %c0 = arith.constant 0 : index
    %c0_0 = arith.constant 0 : index
    %0 = vector.load %arg2[%c0, %c0_0] : memref<8x56xf32, #tpu.memory_space<vmem>>, vector<8x56xf32>
    %c0_1 = arith.constant 0 : index
    %c0_2 = arith.constant 0 : index
    %1 = vector.load %arg3[%c0_1, %c0_2] : memref<8x8xf32, #tpu.memory_space<vmem>>, vector<8x8xf32>
    %c0_i32 = arith.constant 0 : i32
    %2 = arith.index_cast %c0_i32 : i32 to index
    %c0_3 = arith.constant 0 : index
    %c0_4 = arith.constant 0 : index
    %3 = vector.load %arg1[%2, %c0_3, %c0_4] : memref<8x56x2xf32, #tpu.memory_space<vmem>>, vector<1x56x2xf32>
    %4 = vector.shape_cast %3 : vector<1x56x2xf32> to vector<56x2xf32>
    %cst = arith.constant dense<0.000000e+00> : vector<8x2xf32>
    %5 = tpu.matmul %0, %4, %cst {dimension_numbers = #tpu.dot_dimension_numbers<[1], [0], [0], [1], [0, 0, 1, 1], [], []>} : vector<8x56xf32>, vector<56x2xf32>, vector<8x2xf32> -> vector<8x2xf32>
    %6 = arith.index_cast %c0_i32 : i32 to index
    %c0_5 = arith.constant 0 : index
    %c0_6 = arith.constant 0 : index
    %7 = vector.load %arg5[%6, %c0_5, %c0_6] : memref<8x8x2xf32, #tpu.memory_space<vmem>>, vector<1x8x2xf32>
    %8 = vector.shape_cast %7 : vector<1x8x2xf32> to vector<8x2xf32>
    %9 = vector.shape_cast %5 : vector<8x2xf32> to vector<1x8x2xf32>
    tpu.vector_store %arg5[%6, %c0_5, %c0_6], %9 {strides = array<i32>} : memref<8x8x2xf32, #tpu.memory_space<vmem>>, vector<1x8x2xf32>,
    %c1_i32 = arith.constant 1 : i32
    %10 = arith.index_cast %c1_i32 : i32 to index
    %c0_7 = arith.constant 0 : index
    %c0_8 = arith.constant 0 : index
    %11 = vector.load %arg1[%10, %c0_7, %c0_8] : memref<8x56x2xf32, #tpu.memory_space<vmem>>, vector<1x56x2xf32>
    %12 = vector.shape_cast %11 : vector<1x56x2xf32> to vector<56x2xf32>
    %cst_9 = arith.constant dense<0.000000e+00> : vector<8x2xf32>
    %13 = tpu.matmul %0, %12, %cst_9 {dimension_numbers = #tpu.dot_dimension_numbers<[1], [0], [0], [1], [0, 0, 1, 1], [], []>} : vector<8x56xf32>, vector<56x2xf32>, vector<8x2xf32> -> vector<8x2xf32>
    %14 = arith.index_cast %c1_i32 : i32 to index
    %c0_10 = arith.constant 0 : index
    %c0_11 = arith.constant 0 : index
    %15 = vector.load %arg5[%14, %c0_10, %c0_11] : memref<8x8x2xf32, #tpu.memory_space<vmem>>, vector<1x8x2xf32>
    %16 = vector.shape_cast %15 : vector<1x8x2xf32> to vector<8x2xf32>
    %17 = vector.shape_cast %13 : vector<8x2xf32> to vector<1x8x2xf32>
    tpu.vector_store %arg5[%14, %c0_10, %c0_11], %17 {strides = array<i32>} : memref<8x8x2xf32, #tpu.memory_space<vmem>>, vector<1x8x2xf32>,
    %c2_i32 = arith.constant 2 : i32
    %18 = arith.index_cast %c2_i32 : i32 to index
    %c0_12 = arith.constant 0 : index
    %c0_13 = arith.constant 0 : index
    %19 = vector.load %arg1[%18, %c0_12, %c0_13] : memref<8x56x2xf32, #tpu.memory_space<vmem>>, vector<1x56x2xf32>
    %20 = vector.shape_cast %19 : vector<1x56x2xf32> to vector<56x2xf32>
    %cst_14 = arith.constant dense<0.000000e+00> : vector<8x2xf32>
    %21 = tpu.matmul %0, %20, %cst_14 {dimension_numbers = #tpu.dot_dimension_numbers<[1], [0], [0], [1], [0, 0, 1, 1], [], []>} : vector<8x56xf32>, vector<56x2xf32>, vector<8x2xf32> -> vector<8x2xf32>
    %22 = arith.index_cast %c2_i32 : i32 to index
    %c0_15 = arith.constant 0 : index
    %c0_16 = arith.constant 0 : index
    %23 = vector.load %arg5[%22, %c0_15, %c0_16] : memref<8x8x2xf32, #tpu.memory_space<vmem>>, vector<1x8x2xf32>
    %24 = vector.shape_cast %23 : vector<1x8x2xf32> to vector<8x2xf32>
    %25 = vector.shape_cast %21 : vector<8x2xf32> to vector<1x8x2xf32>
    tpu.vector_store %arg5[%22, %c0_15, %c0_16], %25 {strides = array<i32>} : memref<8x8x2xf32, #tpu.memory_space<vmem>>, vector<1x8x2xf32>,
    %c3_i32 = arith.constant 3 : i32
    %26 = arith.index_cast %c3_i32 : i32 to index
    %c0_17 = arith.constant 0 : index
    %c0_18 = arith.constant 0 : index
    %27 = vector.load %arg1[%26, %c0_17, %c0_18] : memref<8x56x2xf32, #tpu.memory_space<vmem>>, vector<1x56x2xf32>
    %28 = vector.shape_cast %27 : vector<1x56x2xf32> to vector<56x2xf32>
    %cst_19 = arith.constant dense<0.000000e+00> : vector<8x2xf32>
    %29 = tpu.matmul %0, %28, %cst_19 {dimension_numbers = #tpu.dot_dimension_numbers<[1], [0], [0], [1], [0, 0, 1, 1], [], []>} : vector<8x56xf32>, vector<56x2xf32>, vector<8x2xf32> -> vector<8x2xf32>
    %30 = arith.index_cast %c3_i32 : i32 to index
    %c0_20 = arith.constant 0 : index
    %c0_21 = arith.constant 0 : index
    %31 = vector.load %arg5[%30, %c0_20, %c0_21] : memref<8x8x2xf32, #tpu.memory_space<vmem>>, vector<1x8x2xf32>
    %32 = vector.shape_cast %31 : vector<1x8x2xf32> to vector<8x2xf32>
    %33 = vector.shape_cast %29 : vector<8x2xf32> to vector<1x8x2xf32>
    tpu.vector_store %arg5[%30, %c0_20, %c0_21], %33 {strides = array<i32>} : memref<8x8x2xf32, #tpu.memory_space<vmem>>, vector<1x8x2xf32>,
    %c4_i32 = arith.constant 4 : i32
    %34 = arith.index_cast %c4_i32 : i32 to index
    %c0_22 = arith.constant 0 : index
    %c0_23 = arith.constant 0 : index
    %35 = vector.load %arg1[%34, %c0_22, %c0_23] : memref<8x56x2xf32, #tpu.memory_space<vmem>>, vector<1x56x2xf32>
    %36 = vector.shape_cast %35 : vector<1x56x2xf32> to vector<56x2xf32>
    %cst_24 = arith.constant dense<0.000000e+00> : vector<8x2xf32>
    %37 = tpu.matmul %0, %36, %cst_24 {dimension_numbers = #tpu.dot_dimension_numbers<[1], [0], [0], [1], [0, 0, 1, 1], [], []>} : vector<8x56xf32>, vector<56x2xf32>, vector<8x2xf32> -> vector<8x2xf32>
    %38 = arith.index_cast %c4_i32 : i32 to index
    %c0_25 = arith.constant 0 : index
    %c0_26 = arith.constant 0 : index
    %39 = vector.load %arg5[%38, %c0_25, %c0_26] : memref<8x8x2xf32, #tpu.memory_space<vmem>>, vector<1x8x2xf32>
    %40 = vector.shape_cast %39 : vector<1x8x2xf32> to vector<8x2xf32>
    %41 = vector.shape_cast %37 : vector<8x2xf32> to vector<1x8x2xf32>
    tpu.vector_store %arg5[%38, %c0_25, %c0_26], %41 {strides = array<i32>} : memref<8x8x2xf32, #tpu.memory_space<vmem>>, vector<1x8x2xf32>,
    %c5_i32 = arith.constant 5 : i32
    %42 = arith.index_cast %c5_i32 : i32 to index
    %c0_27 = arith.constant 0 : index
    %c0_28 = arith.constant 0 : index
    %43 = vector.load %arg1[%42, %c0_27, %c0_28] : memref<8x56x2xf32, #tpu.memory_space<vmem>>, vector<1x56x2xf32>
    %44 = vector.shape_cast %43 : vector<1x56x2xf32> to vector<56x2xf32>
    %cst_29 = arith.constant dense<0.000000e+00> : vector<8x2xf32>
    %45 = tpu.matmul %0, %44, %cst_29 {dimension_numbers = #tpu.dot_dimension_numbers<[1], [0], [0], [1], [0, 0, 1, 1], [], []>} : vector<8x56xf32>, vector<56x2xf32>, vector<8x2xf32> -> vector<8x2xf32>
    %46 = arith.index_cast %c5_i32 : i32 to index
    %c0_30 = arith.constant 0 : index
    %c0_31 = arith.constant 0 : index
    %47 = vector.load %arg5[%46, %c0_30, %c0_31] : memref<8x8x2xf32, #tpu.memory_space<vmem>>, vector<1x8x2xf32>
    %48 = vector.shape_cast %47 : vector<1x8x2xf32> to vector<8x2xf32>
    %49 = vector.shape_cast %45 : vector<8x2xf32> to vector<1x8x2xf32>
    tpu.vector_store %arg5[%46, %c0_30, %c0_31], %49 {strides = array<i32>} : memref<8x8x2xf32, #tpu.memory_space<vmem>>, vector<1x8x2xf32>,
    %c6_i32 = arith.constant 6 : i32
    %50 = arith.index_cast %c6_i32 : i32 to index
    %c0_32 = arith.constant 0 : index
    %c0_33 = arith.constant 0 : index
    %51 = vector.load %arg1[%50, %c0_32, %c0_33] : memref<8x56x2xf32, #tpu.memory_space<vmem>>, vector<1x56x2xf32>
    %52 = vector.shape_cast %51 : vector<1x56x2xf32> to vector<56x2xf32>
    %cst_34 = arith.constant dense<0.000000e+00> : vector<8x2xf32>
    %53 = tpu.matmul %0, %52, %cst_34 {dimension_numbers = #tpu.dot_dimension_numbers<[1], [0], [0], [1], [0, 0, 1, 1], [], []>} : vector<8x56xf32>, vector<56x2xf32>, vector<8x2xf32> -> vector<8x2xf32>
    %54 = arith.index_cast %c6_i32 : i32 to index
    %c0_35 = arith.constant 0 : index
    %c0_36 = arith.constant 0 : index
    %55 = vector.load %arg5[%54, %c0_35, %c0_36] : memref<8x8x2xf32, #tpu.memory_space<vmem>>, vector<1x8x2xf32>
    %56 = vector.shape_cast %55 : vector<1x8x2xf32> to vector<8x2xf32>
    %57 = vector.shape_cast %53 : vector<8x2xf32> to vector<1x8x2xf32>
    tpu.vector_store %arg5[%54, %c0_35, %c0_36], %57 {strides = array<i32>} : memref<8x8x2xf32, #tpu.memory_space<vmem>>, vector<1x8x2xf32>,
    %c7_i32 = arith.constant 7 : i32
    %58 = arith.index_cast %c7_i32 : i32 to index
    %c0_37 = arith.constant 0 : index
    %c0_38 = arith.constant 0 : index
    %59 = vector.load %arg1[%58, %c0_37, %c0_38] : memref<8x56x2xf32, #tpu.memory_space<vmem>>, vector<1x56x2xf32>
    %60 = vector.shape_cast %59 : vector<1x56x2xf32> to vector<56x2xf32>
    %cst_39 = arith.constant dense<0.000000e+00> : vector<8x2xf32>
    %61 = tpu.matmul %0, %60, %cst_39 {dimension_numbers = #tpu.dot_dimension_numbers<[1], [0], [0], [1], [0, 0, 1, 1], [], []>} : vector<8x56xf32>, vector<56x2xf32>, vector<8x2xf32> -> vector<8x2xf32>
    %62 = arith.index_cast %c7_i32 : i32 to index
    %c0_40 = arith.constant 0 : index
    %c0_41 = arith.constant 0 : index
    %63 = vector.load %arg5[%62, %c0_40, %c0_41] : memref<8x8x2xf32, #tpu.memory_space<vmem>>, vector<1x8x2xf32>
    %64 = vector.shape_cast %63 : vector<1x8x2xf32> to vector<8x2xf32>
    %65 = vector.shape_cast %61 : vector<8x2xf32> to vector<1x8x2xf32>
    tpu.vector_store %arg5[%62, %c0_40, %c0_41], %65 {strides = array<i32>} : memref<8x8x2xf32, #tpu.memory_space<vmem>>, vector<1x8x2xf32>,
    %c8_i32 = arith.constant 8 : i32
    %cst_42 = arith.constant 0.000000e+00 : f32
    %66 = vector.broadcast %cst_42 : f32 to vector<8x2xf32>
    %c0_i32_43 = arith.constant 0 : i32
    %67 = arith.index_cast %c0_i32_43 : i32 to index
    %c0_44 = arith.constant 0 : index
    %c0_45 = arith.constant 0 : index
    %68 = vector.load %arg5[%67, %c0_44, %c0_45] : memref<8x8x2xf32, #tpu.memory_space<vmem>>, vector<1x8x2xf32>
    %69 = vector.shape_cast %68 : vector<1x8x2xf32> to vector<8x2xf32>
    %cst_46 = arith.constant dense<0.000000e+00> : vector<8x2xf32>
    %70 = tpu.matmul %1, %66, %cst_46 {dimension_numbers = #tpu.dot_dimension_numbers<[1], [0], [0], [1], [0, 0, 1, 1], [], []>} : vector<8x8xf32>, vector<8x2xf32>, vector<8x2xf32> -> vector<8x2xf32>
    %71 = arith.addf %69, %70 : vector<8x2xf32>
    %72 = math.tanh %71 : vector<8x2xf32>
    %cst_47 = arith.constant 1.000000e+01 : f32
    %73 = vector.broadcast %cst_47 : f32 to vector<8x2xf32>
    %74 = arith.mulf %73, %72 : vector<8x2xf32>
    %75 = arith.index_cast %c0_i32_43 : i32 to index
    %c0_48 = arith.constant 0 : index
    %c0_49 = arith.constant 0 : index
    %76 = vector.load %arg4[%75, %c0_48, %c0_49] : memref<8x8x2xf32, #tpu.memory_space<vmem>>, vector<1x8x2xf32>
    %77 = vector.shape_cast %76 : vector<1x8x2xf32> to vector<8x2xf32>
    %78 = vector.shape_cast %74 : vector<8x2xf32> to vector<1x8x2xf32>
    tpu.vector_store %arg4[%75, %c0_48, %c0_49], %78 {strides = array<i32>} : memref<8x8x2xf32, #tpu.memory_space<vmem>>, vector<1x8x2xf32>,
    %c1_i32_50 = arith.constant 1 : i32
    %79 = arith.index_cast %c1_i32_50 : i32 to index
    %c0_51 = arith.constant 0 : index
    %c0_52 = arith.constant 0 : index
    %80 = vector.load %arg5[%79, %c0_51, %c0_52] : memref<8x8x2xf32, #tpu.memory_space<vmem>>, vector<1x8x2xf32>
    %81 = vector.shape_cast %80 : vector<1x8x2xf32> to vector<8x2xf32>
    %cst_53 = arith.constant dense<0.000000e+00> : vector<8x2xf32>
    %82 = tpu.matmul %1, %72, %cst_53 {dimension_numbers = #tpu.dot_dimension_numbers<[1], [0], [0], [1], [0, 0, 1, 1], [], []>} : vector<8x8xf32>, vector<8x2xf32>, vector<8x2xf32> -> vector<8x2xf32>
    %83 = arith.addf %81, %82 : vector<8x2xf32>
    %84 = math.tanh %83 : vector<8x2xf32>
    %cst_54 = arith.constant 1.000000e+01 : f32
    %85 = vector.broadcast %cst_54 : f32 to vector<8x2xf32>
    %86 = arith.mulf %85, %84 : vector<8x2xf32>
    %87 = arith.index_cast %c1_i32_50 : i32 to index
    %c0_55 = arith.constant 0 : index
    %c0_56 = arith.constant 0 : index
    %88 = vector.load %arg4[%87, %c0_55, %c0_56] : memref<8x8x2xf32, #tpu.memory_space<vmem>>, vector<1x8x2xf32>
    %89 = vector.shape_cast %88 : vector<1x8x2xf32> to vector<8x2xf32>
    %90 = vector.shape_cast %86 : vector<8x2xf32> to vector<1x8x2xf32>
    tpu.vector_store %arg4[%87, %c0_55, %c0_56], %90 {strides = array<i32>} : memref<8x8x2xf32, #tpu.memory_space<vmem>>, vector<1x8x2xf32>,
    %c2_i32_57 = arith.constant 2 : i32
    %91 = arith.index_cast %c2_i32_57 : i32 to index
    %c0_58 = arith.constant 0 : index
    %c0_59 = arith.constant 0 : index
    %92 = vector.load %arg5[%91, %c0_58, %c0_59] : memref<8x8x2xf32, #tpu.memory_space<vmem>>, vector<1x8x2xf32>
    %93 = vector.shape_cast %92 : vector<1x8x2xf32> to vector<8x2xf32>
    %cst_60 = arith.constant dense<0.000000e+00> : vector<8x2xf32>
    %94 = tpu.matmul %1, %84, %cst_60 {dimension_numbers = #tpu.dot_dimension_numbers<[1], [0], [0], [1], [0, 0, 1, 1], [], []>} : vector<8x8xf32>, vector<8x2xf32>, vector<8x2xf32> -> vector<8x2xf32>
    %95 = arith.addf %93, %94 : vector<8x2xf32>
    %96 = math.tanh %95 : vector<8x2xf32>
    %cst_61 = arith.constant 1.000000e+01 : f32
    %97 = vector.broadcast %cst_61 : f32 to vector<8x2xf32>
    %98 = arith.mulf %97, %96 : vector<8x2xf32>
    %99 = arith.index_cast %c2_i32_57 : i32 to index
    %c0_62 = arith.constant 0 : index
    %c0_63 = arith.constant 0 : index
    %100 = vector.load %arg4[%99, %c0_62, %c0_63] : memref<8x8x2xf32, #tpu.memory_space<vmem>>, vector<1x8x2xf32>
    %101 = vector.shape_cast %100 : vector<1x8x2xf32> to vector<8x2xf32>
    %102 = vector.shape_cast %98 : vector<8x2xf32> to vector<1x8x2xf32>
    tpu.vector_store %arg4[%99, %c0_62, %c0_63], %102 {strides = array<i32>} : memref<8x8x2xf32, #tpu.memory_space<vmem>>, vector<1x8x2xf32>,
    %c3_i32_64 = arith.constant 3 : i32
    %103 = arith.index_cast %c3_i32_64 : i32 to index
    %c0_65 = arith.constant 0 : index
    %c0_66 = arith.constant 0 : index
    %104 = vector.load %arg5[%103, %c0_65, %c0_66] : memref<8x8x2xf32, #tpu.memory_space<vmem>>, vector<1x8x2xf32>
    %105 = vector.shape_cast %104 : vector<1x8x2xf32> to vector<8x2xf32>
    %cst_67 = arith.constant dense<0.000000e+00> : vector<8x2xf32>
    %106 = tpu.matmul %1, %96, %cst_67 {dimension_numbers = #tpu.dot_dimension_numbers<[1], [0], [0], [1], [0, 0, 1, 1], [], []>} : vector<8x8xf32>, vector<8x2xf32>, vector<8x2xf32> -> vector<8x2xf32>
    %107 = arith.addf %105, %106 : vector<8x2xf32>
    %108 = math.tanh %107 : vector<8x2xf32>
    %cst_68 = arith.constant 1.000000e+01 : f32
    %109 = vector.broadcast %cst_68 : f32 to vector<8x2xf32>
    %110 = arith.mulf %109, %108 : vector<8x2xf32>
    %111 = arith.index_cast %c3_i32_64 : i32 to index
    %c0_69 = arith.constant 0 : index
    %c0_70 = arith.constant 0 : index
    %112 = vector.load %arg4[%111, %c0_69, %c0_70] : memref<8x8x2xf32, #tpu.memory_space<vmem>>, vector<1x8x2xf32>
    %113 = vector.shape_cast %112 : vector<1x8x2xf32> to vector<8x2xf32>
    %114 = vector.shape_cast %110 : vector<8x2xf32> to vector<1x8x2xf32>
    tpu.vector_store %arg4[%111, %c0_69, %c0_70], %114 {strides = array<i32>} : memref<8x8x2xf32, #tpu.memory_space<vmem>>, vector<1x8x2xf32>,
    %c4_i32_71 = arith.constant 4 : i32
    %115 = arith.index_cast %c4_i32_71 : i32 to index
    %c0_72 = arith.constant 0 : index
    %c0_73 = arith.constant 0 : index
    %116 = vector.load %arg5[%115, %c0_72, %c0_73] : memref<8x8x2xf32, #tpu.memory_space<vmem>>, vector<1x8x2xf32>
    %117 = vector.shape_cast %116 : vector<1x8x2xf32> to vector<8x2xf32>
    %cst_74 = arith.constant dense<0.000000e+00> : vector<8x2xf32>
    %118 = tpu.matmul %1, %108, %cst_74 {dimension_numbers = #tpu.dot_dimension_numbers<[1], [0], [0], [1], [0, 0, 1, 1], [], []>} : vector<8x8xf32>, vector<8x2xf32>, vector<8x2xf32> -> vector<8x2xf32>
    %119 = arith.addf %117, %118 : vector<8x2xf32>
    %120 = math.tanh %119 : vector<8x2xf32>
    %cst_75 = arith.constant 1.000000e+01 : f32
    %121 = vector.broadcast %cst_75 : f32 to vector<8x2xf32>
    %122 = arith.mulf %121, %120 : vector<8x2xf32>
    %123 = arith.index_cast %c4_i32_71 : i32 to index
    %c0_76 = arith.constant 0 : index
    %c0_77 = arith.constant 0 : index
    %124 = vector.load %arg4[%123, %c0_76, %c0_77] : memref<8x8x2xf32, #tpu.memory_space<vmem>>, vector<1x8x2xf32>
    %125 = vector.shape_cast %124 : vector<1x8x2xf32> to vector<8x2xf32>
    %126 = vector.shape_cast %122 : vector<8x2xf32> to vector<1x8x2xf32>
    tpu.vector_store %arg4[%123, %c0_76, %c0_77], %126 {strides = array<i32>} : memref<8x8x2xf32, #tpu.memory_space<vmem>>, vector<1x8x2xf32>,
    %c5_i32_78 = arith.constant 5 : i32
    %127 = arith.index_cast %c5_i32_78 : i32 to index
    %c0_79 = arith.constant 0 : index
    %c0_80 = arith.constant 0 : index
    %128 = vector.load %arg5[%127, %c0_79, %c0_80] : memref<8x8x2xf32, #tpu.memory_space<vmem>>, vector<1x8x2xf32>
    %129 = vector.shape_cast %128 : vector<1x8x2xf32> to vector<8x2xf32>
    %cst_81 = arith.constant dense<0.000000e+00> : vector<8x2xf32>
    %130 = tpu.matmul %1, %120, %cst_81 {dimension_numbers = #tpu.dot_dimension_numbers<[1], [0], [0], [1], [0, 0, 1, 1], [], []>} : vector<8x8xf32>, vector<8x2xf32>, vector<8x2xf32> -> vector<8x2xf32>
    %131 = arith.addf %129, %130 : vector<8x2xf32>
    %132 = math.tanh %131 : vector<8x2xf32>
    %cst_82 = arith.constant 1.000000e+01 : f32
    %133 = vector.broadcast %cst_82 : f32 to vector<8x2xf32>
    %134 = arith.mulf %133, %132 : vector<8x2xf32>
    %135 = arith.index_cast %c5_i32_78 : i32 to index
    %c0_83 = arith.constant 0 : index
    %c0_84 = arith.constant 0 : index
    %136 = vector.load %arg4[%135, %c0_83, %c0_84] : memref<8x8x2xf32, #tpu.memory_space<vmem>>, vector<1x8x2xf32>
    %137 = vector.shape_cast %136 : vector<1x8x2xf32> to vector<8x2xf32>
    %138 = vector.shape_cast %134 : vector<8x2xf32> to vector<1x8x2xf32>
    tpu.vector_store %arg4[%135, %c0_83, %c0_84], %138 {strides = array<i32>} : memref<8x8x2xf32, #tpu.memory_space<vmem>>, vector<1x8x2xf32>,
    %c6_i32_85 = arith.constant 6 : i32
    %139 = arith.index_cast %c6_i32_85 : i32 to index
    %c0_86 = arith.constant 0 : index
    %c0_87 = arith.constant 0 : index
    %140 = vector.load %arg5[%139, %c0_86, %c0_87] : memref<8x8x2xf32, #tpu.memory_space<vmem>>, vector<1x8x2xf32>
    %141 = vector.shape_cast %140 : vector<1x8x2xf32> to vector<8x2xf32>
    %cst_88 = arith.constant dense<0.000000e+00> : vector<8x2xf32>
    %142 = tpu.matmul %1, %132, %cst_88 {dimension_numbers = #tpu.dot_dimension_numbers<[1], [0], [0], [1], [0, 0, 1, 1], [], []>} : vector<8x8xf32>, vector<8x2xf32>, vector<8x2xf32> -> vector<8x2xf32>
    %143 = arith.addf %141, %142 : vector<8x2xf32>
    %144 = math.tanh %143 : vector<8x2xf32>
    %cst_89 = arith.constant 1.000000e+01 : f32
    %145 = vector.broadcast %cst_89 : f32 to vector<8x2xf32>
    %146 = arith.mulf %145, %144 : vector<8x2xf32>
    %147 = arith.index_cast %c6_i32_85 : i32 to index
    %c0_90 = arith.constant 0 : index
    %c0_91 = arith.constant 0 : index
    %148 = vector.load %arg4[%147, %c0_90, %c0_91] : memref<8x8x2xf32, #tpu.memory_space<vmem>>, vector<1x8x2xf32>
    %149 = vector.shape_cast %148 : vector<1x8x2xf32> to vector<8x2xf32>
    %150 = vector.shape_cast %146 : vector<8x2xf32> to vector<1x8x2xf32>
    tpu.vector_store %arg4[%147, %c0_90, %c0_91], %150 {strides = array<i32>} : memref<8x8x2xf32, #tpu.memory_space<vmem>>, vector<1x8x2xf32>,
    %c7_i32_92 = arith.constant 7 : i32
    %151 = arith.index_cast %c7_i32_92 : i32 to index
    %c0_93 = arith.constant 0 : index
    %c0_94 = arith.constant 0 : index
    %152 = vector.load %arg5[%151, %c0_93, %c0_94] : memref<8x8x2xf32, #tpu.memory_space<vmem>>, vector<1x8x2xf32>
    %153 = vector.shape_cast %152 : vector<1x8x2xf32> to vector<8x2xf32>
    %cst_95 = arith.constant dense<0.000000e+00> : vector<8x2xf32>
    %154 = tpu.matmul %1, %144, %cst_95 {dimension_numbers = #tpu.dot_dimension_numbers<[1], [0], [0], [1], [0, 0, 1, 1], [], []>} : vector<8x8xf32>, vector<8x2xf32>, vector<8x2xf32> -> vector<8x2xf32>
    %155 = arith.addf %153, %154 : vector<8x2xf32>
    %156 = math.tanh %155 : vector<8x2xf32>
    %cst_96 = arith.constant 1.000000e+01 : f32
    %157 = vector.broadcast %cst_96 : f32 to vector<8x2xf32>
    %158 = arith.mulf %157, %156 : vector<8x2xf32>
    %159 = arith.index_cast %c7_i32_92 : i32 to index
    %c0_97 = arith.constant 0 : index
    %c0_98 = arith.constant 0 : index
    %160 = vector.load %arg4[%159, %c0_97, %c0_98] : memref<8x8x2xf32, #tpu.memory_space<vmem>>, vector<1x8x2xf32>
    %161 = vector.shape_cast %160 : vector<1x8x2xf32> to vector<8x2xf32>
    %162 = vector.shape_cast %158 : vector<8x2xf32> to vector<1x8x2xf32>
    tpu.vector_store %arg4[%159, %c0_97, %c0_98], %162 {strides = array<i32>} : memref<8x8x2xf32, #tpu.memory_space<vmem>>, vector<1x8x2xf32>,
    %c8_i32_99 = arith.constant 8 : i32
    return
  }
  func.func @transform_0(%arg0: i32) -> (i32, i32, i32) {
    %c0_i32 = arith.constant 0 : i32
    %c0_i32_0 = arith.constant 0 : i32
    %c0_i32_1 = arith.constant 0 : i32
    return %c0_i32, %c0_i32_0, %arg0 : i32, i32, i32
  }
  func.func @transform_1(%arg0: i32) -> (i32, i32) {
    %c0_i32 = arith.constant 0 : i32
    %c0_i32_0 = arith.constant 0 : i32
    %c0_i32_1 = arith.constant 0 : i32
    return %c0_i32, %c0_i32_0 : i32, i32
  }
  func.func @transform_2(%arg0: i32) -> (i32, i32) {
    %c0_i32 = arith.constant 0 : i32
    %c0_i32_0 = arith.constant 0 : i32
    %c0_i32_1 = arith.constant 0 : i32
    return %c0_i32, %c0_i32_0 : i32, i32
  }
  func.func @transform_3(%arg0: i32) -> (i32, i32, i32) {
    %c0_i32 = arith.constant 0 : i32
    %c0_i32_0 = arith.constant 0 : i32
    %c0_i32_1 = arith.constant 0 : i32
    return %c0_i32, %c0_i32_0, %arg0 : i32, i32, i32
  }
}

</mosaic_0001>

<llo_original>
// kernel: tpu_custom_call.1
$region0: #{tpu_custom_call.1}
  #allocation0 [shape = 'u32[]', space=smem, size = 0x4, offset = 0x4, fixed_abs, tag = 'smem constant byte address 0x4 - core index']
  #allocation1 [shape = 'u32[144,128]{1,0:T(1,128)}', space=vmem, size = 0x12000, scoped, tag = 'internal scratch']
  #allocation2 [shape = 'f32[8,8,2]{2,1,0:T(8,128)}', space=vmem, size = 0x8000, scoped, tag = 'scratch operand']
  %s0 = inlined_call_operand.vmem [shape: f32[8,56,2], index: 0, kind: input, shape index: {}]
  %s1 = inlined_call_operand.vmem [shape: f32[8,56], index: 1, kind: input, shape index: {}]
  %s2 = inlined_call_operand.vmem [shape: f32[8,8], index: 2, kind: input, shape index: {}]
  %s3 = inlined_call_operand.vmem [shape: f32[8,8,2], index: 3, kind: output, shape index: {}]
  %s4 = sld [smem:[#allocation0]]
  $region22: #{tpu_custom_call.1} parent=0
    _
  %s6 = ssub.s32 1, %s4
  %s7 = scalar_select 0, %s6, %s4
  // Predicated region
  $region2: #{tpu_custom_call.1} parent=0 // pred_check
    _
  $region3: #{tpu_custom_call.1} parent=0 // pred_check_branch
    %9 = sbr.rel (0) target = $region5
  $region4: #{tpu_custom_call.1} parent=0 // pred_region
    _
  $region5: #{tpu_custom_call.1} parent=0 // pred_fallthru
    _
  // Predicated region
  $region6: #{tpu_custom_call.1} parent=0 // pred_check
    _
  $region7: #{tpu_custom_call.1} parent=0 // pred_check_branch
    %11 = sbr.rel (0) target = $region9
  $region8: #{tpu_custom_call.1} parent=0 // pred_region
    _
  $region9: #{tpu_custom_call.1} parent=0 // pred_fallthru
    _
  // Predicated region
  $region10: #{tpu_custom_call.1} parent=0 // pred_check
    _
  $region11: #{tpu_custom_call.1} parent=0 // pred_check_branch
    %13 = sbr.rel (0) target = $region13
  $region12: #{tpu_custom_call.1} parent=0 // pred_region
    _
  $region13: #{tpu_custom_call.1} parent=0 // pred_fallthru
    _
  %v14 = vld [vmem:[%s1] sm:$0xff]
  %v15 = vld [vmem:[%s2] sm:$0xff]
  %v16 = vld [vmem:[%s0] sm:$0xff]
  %v17 = vld [vmem:[%s0 + $0x8] sm:$0xff]
  %v18 = vld [vmem:[%s0 + $0x10] sm:$0xff]
  %v19 = vld [vmem:[%s0 + $0x18] sm:$0xff]
  %v20 = vld [vmem:[%s0 + $0x20] sm:$0xff]
  %v21 = vld [vmem:[%s0 + $0x28] sm:$0xff]
  %v22 = vld [vmem:[%s0 + $0x30] sm:$0xff]
  %vm23 = vcmask 457728
  %v25 = vsel %vm23, %v14, 0
  %27 = vmatprep.subr.mxu0 0.0
  %28 = vmatpush1.msra.mxu0 %v16
  %29 = vmatprep.subr.mxu0 0.0
  %30 = vmatpush1.msra.mxu0 %v17
  %31 = vmatprep.subr.mxu0 0.0
  %32 = vmatpush1.msra.mxu0 %v18
  %33 = vmatprep.subr.mxu0 0.0
  %34 = vmatpush1.msra.mxu0 %v19
  %35 = vmatprep.subr.mxu0 0.0
  %36 = vmatpush1.msra.mxu0 %v20
  %37 = vmatprep.subr.mxu0 0.0
  %38 = vmatpush1.msra.mxu0 %v21
  %39 = vmatprep.subr.mxu0 0.0
  %40 = vmatpush1.msra.mxu0 %v22
  %41 = vmatprep.subr.mxu0 0.0
  %42 = vmatpush1.msra.mxu0 0.0
  %43 = vmatprep.subr.mxu0 0.0
  %44 = vmatpush1.msra.mxu0 0.0
  %45 = vmatprep.subr.mxu0 0.0
  %46 = vmatpush1.msra.mxu0 0.0
  %47 = vmatprep.subr.mxu0 0.0
  %48 = vmatpush1.msra.mxu0 0.0
  %49 = vmatprep.subr.mxu0 0.0
  %50 = vmatpush1.msra.mxu0 0.0
  %51 = vmatprep.subr.mxu0 0.0
  %52 = vmatpush1.msra.mxu0 0.0
  %53 = vmatprep.subr.mxu0 0.0
  %54 = vmatpush1.msra.mxu0 0.0
  %55 = vmatprep.subr.mxu0 0.0
  %56 = vmatpush1.msra.mxu0 0.0
  %57 = vmatprep.subr.mxu0 0.0
  %58 = vmatpush1.msra.mxu0 0.0
  %59 = vmatprep.subr.mxu0 0.0
  %60 = vmatpush1.msra.mxu0 0.0
  %61 = vmatprep.subr.mxu0 0.0
  %62 = vmatpush1.msra.mxu0 0.0
  %63 = vmatprep.subr.mxu0 0.0
  %64 = vmatpush1.msra.mxu0 0.0
  %65 = vmatprep.subr.mxu0 0.0
  %66 = vmatpush1.msra.mxu0 0.0
  %67 = vmatprep.subr.mxu0 0.0
  %68 = vmatpush1.msra.mxu0 0.0
  %69 = vmatprep.subr.mxu0 0.0
  %70 = vmatpush1.msra.mxu0 0.0
  %71 = vmatprep.subr.mxu0 0.0
  %72 = vmatpush1.msra.mxu0 0.0
  %73 = vmatprep.subr.mxu0 0.0
  %74 = vmatpush1.msra.mxu0 0.0
  %75 = vmatprep.subr.mxu0 0.0
  %76 = vmatpush1.msra.mxu0 0.0
  %77 = vmatprep.subr.mxu0 0.0
  %78 = vmatpush1.msra.mxu0 0.0
  %79 = vmatprep.subr.mxu0 0.0
  %80 = vmatpush1.msra.mxu0 0.0
  %81 = vmatprep.subr.mxu0 0.0
  %82 = vmatpush1.msra.mxu0 0.0
  %83 = vmatprep.subr.mxu0 0.0
  %84 = vmatpush1.msra.mxu0 0.0
  %85 = vmatprep.subr.mxu0 0.0
  %86 = vmatpush1.msra.mxu0 0.0
  %87 = vmatprep.subr.mxu0 0.0
  %88 = vmatpush1.msra.mxu0 0.0
  %89 = vmatprep.subr.mxu0 0.0
  %90 = vmatpush1.msra.mxu0 0.0
  %91 = vmatprep.mubr.f32.mxu0 0.0
  %92 = vmatmul.mubr.f32.gmra.mrb[0].mxu0 %v25
  %v93 = vpop.f32.mrb[0].mxu0
  %v94 = vadd.f32 0.0, %v93
  %v95 = vpop.f32.mrb[0].mxu0
  %96 = vdwg.mxu0
  %vm97 = vcmask 15360
  %98 = vst.msk [vmem:[#allocation2] sm:$0xff] %vm97, %v94
  %s99 = scalar_lea.vmem %s0, 56
  %v100 = vld [vmem:[%s99] sm:$0xff]
  %v101 = vld [vmem:[%s99 + $0x8] sm:$0xff]
  %v102 = vld [vmem:[%s99 + $0x10] sm:$0xff]
  %v103 = vld [vmem:[%s99 + $0x18] sm:$0xff]
  %v104 = vld [vmem:[%s99 + $0x20] sm:$0xff]
  %v105 = vld [vmem:[%s99 + $0x28] sm:$0xff]
  %v106 = vld [vmem:[%s99 + $0x30] sm:$0xff]
  %107 = vmatprep.subr.mxu0 0.0
  %108 = vmatpush1.msra.mxu0 %v100
  %109 = vmatprep.subr.mxu0 0.0
  %110 = vmatpush1.msra.mxu0 %v101
  %111 = vmatprep.subr.mxu0 0.0
  %112 = vmatpush1.msra.mxu0 %v102
  %113 = vmatprep.subr.mxu0 0.0
  %114 = vmatpush1.msra.mxu0 %v103
  %115 = vmatprep.subr.mxu0 0.0
  %116 = vmatpush1.msra.mxu0 %v104
  %117 = vmatprep.subr.mxu0 0.0
  %118 = vmatpush1.msra.mxu0 %v105
  %119 = vmatprep.subr.mxu0 0.0
  %120 = vmatpush1.msra.mxu0 %v106
  %121 = vmatprep.subr.mxu0 0.0
  %122 = vmatpush1.msra.mxu0 0.0
  %123 = vmatprep.subr.mxu0 0.0
  %124 = vmatpush1.msra.mxu0 0.0
  %125 = vmatprep.subr.mxu0 0.0
  %126 = vmatpush1.msra.mxu0 0.0
  %127 = vmatprep.subr.mxu0 0.0
  %128 = vmatpush1.msra.mxu0 0.0
  %129 = vmatprep.subr.mxu0 0.0
  %130 = vmatpush1.msra.mxu0 0.0
  %131 = vmatprep.subr.mxu0 0.0
  %132 = vmatpush1.msra.mxu0 0.0
  %133 = vmatprep.subr.mxu0 0.0
  %134 = vmatpush1.msra.mxu0 0.0
  %135 = vmatprep.subr.mxu0 0.0
  %136 = vmatpush1.msra.mxu0 0.0
  %137 = vmatprep.subr.mxu0 0.0
  %138 = vmatpush1.msra.mxu0 0.0
  %139 = vmatprep.subr.mxu0 0.0
  %140 = vmatpush1.msra.mxu0 0.0
  %141 = vmatprep.subr.mxu0 0.0
  %142 = vmatpush1.msra.mxu0 0.0
  %143 = vmatprep.subr.mxu0 0.0
  %144 = vmatpush1.msra.mxu0 0.0
  %145 = vmatprep.subr.mxu0 0.0
  %146 = vmatpush1.msra.mxu0 0.0
  %147 = vmatprep.subr.mxu0 0.0
  %148 = vmatpush1.msra.mxu0 0.0
  %149 = vmatprep.subr.mxu0 0.0
  %150 = vmatpush1.msra.mxu0 0.0
  %151 = vmatprep.subr.mxu0 0.0
  %152 = vmatpush1.msra.mxu0 0.0
  %153 = vmatprep.subr.mxu0 0.0
  %154 = vmatpush1.msra.mxu0 0.0
  %155 = vmatprep.subr.mxu0 0.0
  %156 = vmatpush1.msra.mxu0 0.0
  %157 = vmatprep.subr.mxu0 0.0
  %158 = vmatpush1.msra.mxu0 0.0
  %159 = vmatprep.subr.mxu0 0.0
  %160 = vmatpush1.msra.mxu0 0.0
  %161 = vmatprep.subr.mxu0 0.0
  %162 = vmatpush1.msra.mxu0 0.0
  %163 = vmatprep.subr.mxu0 0.0
  %164 = vmatpush1.msra.mxu0 0.0
  %165 = vmatprep.subr.mxu0 0.0
  %166 = vmatpush1.msra.mxu0 0.0
  %167 = vmatprep.subr.mxu0 0.0
  %168 = vmatpush1.msra.mxu0 0.0
  %169 = vmatprep.subr.mxu0 0.0
  %170 = vmatpush1.msra.mxu0 0.0
  %171 = vmatprep.mubr.f32.mxu0 0.0
  %172 = vmatmul.mubr.f32.gmra.mrb[0].mxu0 %v25
  %v173 = vpop.f32.mrb[0].mxu0
  %v174 = vadd.f32 0.0, %v173
  %v175 = vpop.f32.mrb[0].mxu0
  %176 = vdwg.mxu0
  %s177 = scalar_lea.vmem [#allocation2], 8
  %178 = vst.msk [vmem:[%s177] sm:$0xff] %vm97, %v174
  %s179 = scalar_lea.vmem %s0, 112
  %v180 = vld [vmem:[%s179] sm:$0xff]
  %v181 = vld [vmem:[%s179 + $0x8] sm:$0xff]
  %v182 = vld [vmem:[%s179 + $0x10] sm:$0xff]
  %v183 = vld [vmem:[%s179 + $0x18] sm:$0xff]
  %v184 = vld [vmem:[%s179 + $0x20] sm:$0xff]
  %v185 = vld [vmem:[%s179 + $0x28] sm:$0xff]
  %v186 = vld [vmem:[%s179 + $0x30] sm:$0xff]
  %187 = vmatprep.subr.mxu0 0.0
  %188 = vmatpush1.msra.mxu0 %v180
  %189 = vmatprep.subr.mxu0 0.0
  %190 = vmatpush1.msra.mxu0 %v181
  %191 = vmatprep.subr.mxu0 0.0
  %192 = vmatpush1.msra.mxu0 %v182
  %193 = vmatprep.subr.mxu0 0.0
  %194 = vmatpush1.msra.mxu0 %v183
  %195 = vmatprep.subr.mxu0 0.0
  %196 = vmatpush1.msra.mxu0 %v184
  %197 = vmatprep.subr.mxu0 0.0
  %198 = vmatpush1.msra.mxu0 %v185
  %199 = vmatprep.subr.mxu0 0.0
  %200 = vmatpush1.msra.mxu0 %v186
  %201 = vmatprep.subr.mxu0 0.0
  %202 = vmatpush1.msra.mxu0 0.0
  %203 = vmatprep.subr.mxu0 0.0
  %204 = vmatpush1.msra.mxu0 0.0
  %205 = vmatprep.subr.mxu0 0.0
  %206 = vmatpush1.msra.mxu0 0.0
  %207 = vmatprep.subr.mxu0 0.0
  %208 = vmatpush1.msra.mxu0 0.0
  %209 = vmatprep.subr.mxu0 0.0
  %210 = vmatpush1.msra.mxu0 0.0
  %211 = vmatprep.subr.mxu0 0.0
  %212 = vmatpush1.msra.mxu0 0.0
  %213 = vmatprep.subr.mxu0 0.0
  %214 = vmatpush1.msra.mxu0 0.0
  %215 = vmatprep.subr.mxu0 0.0
  %216 = vmatpush1.msra.mxu0 0.0
  %217 = vmatprep.subr.mxu0 0.0
  %218 = vmatpush1.msra.mxu0 0.0
  %219 = vmatprep.subr.mxu0 0.0
  %220 = vmatpush1.msra.mxu0 0.0
  %221 = vmatprep.subr.mxu0 0.0
  %222 = vmatpush1.msra.mxu0 0.0
  %223 = vmatprep.subr.mxu0 0.0
  %224 = vmatpush1.msra.mxu0 0.0
  %225 = vmatprep.subr.mxu0 0.0
  %226 = vmatpush1.msra.mxu0 0.0
  %227 = vmatprep.subr.mxu0 0.0
  %228 = vmatpush1.msra.mxu0 0.0
  %229 = vmatprep.subr.mxu0 0.0
  %230 = vmatpush1.msra.mxu0 0.0
  %231 = vmatprep.subr.mxu0 0.0
  %232 = vmatpush1.msra.mxu0 0.0
  %233 = vmatprep.subr.mxu0 0.0
  %234 = vmatpush1.msra.mxu0 0.0
  %235 = vmatprep.subr.mxu0 0.0
  %236 = vmatpush1.msra.mxu0 0.0
  %237 = vmatprep.subr.mxu0 0.0
  %238 = vmatpush1.msra.mxu0 0.0
  %239 = vmatprep.subr.mxu0 0.0
  %240 = vmatpush1.msra.mxu0 0.0
  %241 = vmatprep.subr.mxu0 0.0
  %242 = vmatpush1.msra.mxu0 0.0
  %243 = vmatprep.subr.mxu0 0.0
  %244 = vmatpush1.msra.mxu0 0.0
  %245 = vmatprep.subr.mxu0 0.0
  %246 = vmatpush1.msra.mxu0 0.0
  %247 = vmatprep.subr.mxu0 0.0
  %248 = vmatpush1.msra.mxu0 0.0
  %249 = vmatprep.subr.mxu0 0.0
  %250 = vmatpush1.msra.mxu0 0.0
  %251 = vmatprep.mubr.f32.mxu0 0.0
  %252 = vmatmul.mubr.f32.gmra.mrb[0].mxu0 %v25
  %v253 = vpop.f32.mrb[0].mxu0
  %v254 = vadd.f32 0.0, %v253
  %v255 = vpop.f32.mrb[0].mxu0
  %256 = vdwg.mxu0
  %s257 = scalar_lea.vmem [#allocation2], 16
  %258 = vst.msk [vmem:[%s257] sm:$0xff] %vm97, %v254
  %s259 = scalar_lea.vmem %s0, 168
  %v260 = vld [vmem:[%s259] sm:$0xff]
  %v261 = vld [vmem:[%s259 + $0x8] sm:$0xff]
  %v262 = vld [vmem:[%s259 + $0x10] sm:$0xff]
  %v263 = vld [vmem:[%s259 + $0x18] sm:$0xff]
  %v264 = vld [vmem:[%s259 + $0x20] sm:$0xff]
  %v265 = vld [vmem:[%s259 + $0x28] sm:$0xff]
  %v266 = vld [vmem:[%s259 + $0x30] sm:$0xff]
  %267 = vmatprep.subr.mxu0 0.0
  %268 = vmatpush1.msra.mxu0 %v260
  %269 = vmatprep.subr.mxu0 0.0
  %270 = vmatpush1.msra.mxu0 %v261
  %271 = vmatprep.subr.mxu0 0.0
  %272 = vmatpush1.msra.mxu0 %v262
  %273 = vmatprep.subr.mxu0 0.0
  %274 = vmatpush1.msra.mxu0 %v263
  %275 = vmatprep.subr.mxu0 0.0
  %276 = vmatpush1.msra.mxu0 %v264
  %277 = vmatprep.subr.mxu0 0.0
  %278 = vmatpush1.msra.mxu0 %v265
  %279 = vmatprep.subr.mxu0 0.0
  %280 = vmatpush1.msra.mxu0 %v266
  %281 = vmatprep.subr.mxu0 0.0
  %282 = vmatpush1.msra.mxu0 0.0
  %283 = vmatprep.subr.mxu0 0.0
  %284 = vmatpush1.msra.mxu0 0.0
  %285 = vmatprep.subr.mxu0 0.0
  %286 = vmatpush1.msra.mxu0 0.0
  %287 = vmatprep.subr.mxu0 0.0
  %288 = vmatpush1.msra.mxu0 0.0
  %289 = vmatprep.subr.mxu0 0.0
  %290 = vmatpush1.msra.mxu0 0.0
  %291 = vmatprep.subr.mxu0 0.0
  %292 = vmatpush1.msra.mxu0 0.0
  %293 = vmatprep.subr.mxu0 0.0
  %294 = vmatpush1.msra.mxu0 0.0
  %295 = vmatprep.subr.mxu0 0.0
  %296 = vmatpush1.msra.mxu0 0.0
  %297 = vmatprep.subr.mxu0 0.0
  %298 = vmatpush1.msra.mxu0 0.0
  %299 = vmatprep.subr.mxu0 0.0
  %300 = vmatpush1.msra.mxu0 0.0
  %301 = vmatprep.subr.mxu0 0.0
  %302 = vmatpush1.msra.mxu0 0.0
  %303 = vmatprep.subr.mxu0 0.0
  %304 = vmatpush1.msra.mxu0 0.0
  %305 = vmatprep.subr.mxu0 0.0
  %306 = vmatpush1.msra.mxu0 0.0
  %307 = vmatprep.subr.mxu0 0.0
  %308 = vmatpush1.msra.mxu0 0.0
  %309 = vmatprep.subr.mxu0 0.0
  %310 = vmatpush1.msra.mxu0 0.0
  %311 = vmatprep.subr.mxu0 0.0
  %312 = vmatpush1.msra.mxu0 0.0
  %313 = vmatprep.subr.mxu0 0.0
  %314 = vmatpush1.msra.mxu0 0.0
  %315 = vmatprep.subr.mxu0 0.0
  %316 = vmatpush1.msra.mxu0 0.0
  %317 = vmatprep.subr.mxu0 0.0
  %318 = vmatpush1.msra.mxu0 0.0
  %319 = vmatprep.subr.mxu0 0.0
  %320 = vmatpush1.msra.mxu0 0.0
  %321 = vmatprep.subr.mxu0 0.0
  %322 = vmatpush1.msra.mxu0 0.0
  %323 = vmatprep.subr.mxu0 0.0
  %324 = vmatpush1.msra.mxu0 0.0
  %325 = vmatprep.subr.mxu0 0.0
  %326 = vmatpush1.msra.mxu0 0.0
  %327 = vmatprep.subr.mxu0 0.0
  %328 = vmatpush1.msra.mxu0 0.0
  %329 = vmatprep.subr.mxu0 0.0
  %330 = vmatpush1.msra.mxu0 0.0
  %331 = vmatprep.mubr.f32.mxu0 0.0
  %332 = vmatmul.mubr.f32.gmra.mrb[0].mxu0 %v25
  %v333 = vpop.f32.mrb[0].mxu0
  %v334 = vadd.f32 0.0, %v333
  %v335 = vpop.f32.mrb[0].mxu0
  %336 = vdwg.mxu0
  %s337 = scalar_lea.vmem [#allocation2], 24
  %338 = vst.msk [vmem:[%s337] sm:$0xff] %vm97, %v334
  %s339 = scalar_lea.vmem %s0, 224
  %v340 = vld [vmem:[%s339] sm:$0xff]
  %v341 = vld [vmem:[%s339 + $0x8] sm:$0xff]
  %v342 = vld [vmem:[%s339 + $0x10] sm:$0xff]
  %v343 = vld [vmem:[%s339 + $0x18] sm:$0xff]
  %v344 = vld [vmem:[%s339 + $0x20] sm:$0xff]
  %v345 = vld [vmem:[%s339 + $0x28] sm:$0xff]
  %v346 = vld [vmem:[%s339 + $0x30] sm:$0xff]
  %347 = vmatprep.subr.mxu0 0.0
  %348 = vmatpush1.msra.mxu0 %v340
  %349 = vmatprep.subr.mxu0 0.0
  %350 = vmatpush1.msra.mxu0 %v341
  %351 = vmatprep.subr.mxu0 0.0
  %352 = vmatpush1.msra.mxu0 %v342
  %353 = vmatprep.subr.mxu0 0.0
  %354 = vmatpush1.msra.mxu0 %v343
  %355 = vmatprep.subr.mxu0 0.0
  %356 = vmatpush1.msra.mxu0 %v344
  %357 = vmatprep.subr.mxu0 0.0
  %358 = vmatpush1.msra.mxu0 %v345
  %359 = vmatprep.subr.mxu0 0.0
  %360 = vmatpush1.msra.mxu0 %v346
  %361 = vmatprep.subr.mxu0 0.0
  %362 = vmatpush1.msra.mxu0 0.0
  %363 = vmatprep.subr.mxu0 0.0
  %364 = vmatpush1.msra.mxu0 0.0
  %365 = vmatprep.subr.mxu0 0.0
  %366 = vmatpush1.msra.mxu0 0.0
  %367 = vmatprep.subr.mxu0 0.0
  %368 = vmatpush1.msra.mxu0 0.0
  %369 = vmatprep.subr.mxu0 0.0
  %370 = vmatpush1.msra.mxu0 0.0
  %371 = vmatprep.subr.mxu0 0.0
  %372 = vmatpush1.msra.mxu0 0.0
  %373 = vmatprep.subr.mxu0 0.0
  %374 = vmatpush1.msra.mxu0 0.0
  %375 = vmatprep.subr.mxu0 0.0
  %376 = vmatpush1.msra.mxu0 0.0
  %377 = vmatprep.subr.mxu0 0.0
  %378 = vmatpush1.msra.mxu0 0.0
  %379 = vmatprep.subr.mxu0 0.0
  %380 = vmatpush1.msra.mxu0 0.0
  %381 = vmatprep.subr.mxu0 0.0
  %382 = vmatpush1.msra.mxu0 0.0
  %383 = vmatprep.subr.mxu0 0.0
  %384 = vmatpush1.msra.mxu0 0.0
  %385 = vmatprep.subr.mxu0 0.0
  %386 = vmatpush1.msra.mxu0 0.0
  %387 = vmatprep.subr.mxu0 0.0
  %388 = vmatpush1.msra.mxu0 0.0
  %389 = vmatprep.subr.mxu0 0.0
  %390 = vmatpush1.msra.mxu0 0.0
  %391 = vmatprep.subr.mxu0 0.0
  %392 = vmatpush1.msra.mxu0 0.0
  %393 = vmatprep.subr.mxu0 0.0
  %394 = vmatpush1.msra.mxu0 0.0
  %395 = vmatprep.subr.mxu0 0.0
  %396 = vmatpush1.msra.mxu0 0.0
  %397 = vmatprep.subr.mxu0 0.0
  %398 = vmatpush1.msra.mxu0 0.0
  %399 = vmatprep.subr.mxu0 0.0
  %400 = vmatpush1.msra.mxu0 0.0
  %401 = vmatprep.subr.mxu0 0.0
  %402 = vmatpush1.msra.mxu0 0.0
  %403 = vmatprep.subr.mxu0 0.0
  %404 = vmatpush1.msra.mxu0 0.0
  %405 = vmatprep.subr.mxu0 0.0
  %406 = vmatpush1.msra.mxu0 0.0
  %407 = vmatprep.subr.mxu0 0.0
  %408 = vmatpush1.msra.mxu0 0.0
  %409 = vmatprep.subr.mxu0 0.0
  %410 = vmatpush1.msra.mxu0 0.0
  %411 = vmatprep.mubr.f32.mxu0 0.0
  %412 = vmatmul.mubr.f32.gmra.mrb[0].mxu0 %v25
  %v413 = vpop.f32.mrb[0].mxu0
  %v414 = vadd.f32 0.0, %v413
  %v415 = vpop.f32.mrb[0].mxu0
  %416 = vdwg.mxu0
  %s417 = scalar_lea.vmem [#allocation2], 32
  %418 = vst.msk [vmem:[%s417] sm:$0xff] %vm97, %v414
  %s419 = scalar_lea.vmem %s0, 280
  %v420 = vld [vmem:[%s419] sm:$0xff]
  %v421 = vld [vmem:[%s419 + $0x8] sm:$0xff]
  %v422 = vld [vmem:[%s419 + $0x10] sm:$0xff]
  %v423 = vld [vmem:[%s419 + $0x18] sm:$0xff]
  %v424 = vld [vmem:[%s419 + $0x20] sm:$0xff]
  %v425 = vld [vmem:[%s419 + $0x28] sm:$0xff]
  %v426 = vld [vmem:[%s419 + $0x30] sm:$0xff]
  %427 = vmatprep.subr.mxu0 0.0
  %428 = vmatpush1.msra.mxu0 %v420
  %429 = vmatprep.subr.mxu0 0.0
  %430 = vmatpush1.msra.mxu0 %v421
  %431 = vmatprep.subr.mxu0 0.0
  %432 = vmatpush1.msra.mxu0 %v422
  %433 = vmatprep.subr.mxu0 0.0
  %434 = vmatpush1.msra.mxu0 %v423
  %435 = vmatprep.subr.mxu0 0.0
  %436 = vmatpush1.msra.mxu0 %v424
  %437 = vmatprep.subr.mxu0 0.0
  %438 = vmatpush1.msra.mxu0 %v425
  %439 = vmatprep.subr.mxu0 0.0
  %440 = vmatpush1.msra.mxu0 %v426
  %441 = vmatprep.subr.mxu0 0.0
  %442 = vmatpush1.msra.mxu0 0.0
  %443 = vmatprep.subr.mxu0 0.0
  %444 = vmatpush1.msra.mxu0 0.0
  %445 = vmatprep.subr.mxu0 0.0
  %446 = vmatpush1.msra.mxu0 0.0
  %447 = vmatprep.subr.mxu0 0.0
  %448 = vmatpush1.msra.mxu0 0.0
  %449 = vmatprep.subr.mxu0 0.0
  %450 = vmatpush1.msra.mxu0 0.0
  %451 = vmatprep.subr.mxu0 0.0
  %452 = vmatpush1.msra.mxu0 0.0
  %453 = vmatprep.subr.mxu0 0.0
  %454 = vmatpush1.msra.mxu0 0.0
  %455 = vmatprep.subr.mxu0 0.0
  %456 = vmatpush1.msra.mxu0 0.0
  %457 = vmatprep.subr.mxu0 0.0
  %458 = vmatpush1.msra.mxu0 0.0
  %459 = vmatprep.subr.mxu0 0.0
  %460 = vmatpush1.msra.mxu0 0.0
  %461 = vmatprep.subr.mxu0 0.0
  %462 = vmatpush1.msra.mxu0 0.0
  %463 = vmatprep.subr.mxu0 0.0
  %464 = vmatpush1.msra.mxu0 0.0
  %465 = vmatprep.subr.mxu0 0.0
  %466 = vmatpush1.msra.mxu0 0.0
  %467 = vmatprep.subr.mxu0 0.0
  %468 = vmatpush1.msra.mxu0 0.0
  %469 = vmatprep.subr.mxu0 0.0
  %470 = vmatpush1.msra.mxu0 0.0
  %471 = vmatprep.subr.mxu0 0.0
  %472 = vmatpush1.msra.mxu0 0.0
  %473 = vmatprep.subr.mxu0 0.0
  %474 = vmatpush1.msra.mxu0 0.0
  %475 = vmatprep.subr.mxu0 0.0
  %476 = vmatpush1.msra.mxu0 0.0
  %477 = vmatprep.subr.mxu0 0.0
  %478 = vmatpush1.msra.mxu0 0.0
  %479 = vmatprep.subr.mxu0 0.0
  %480 = vmatpush1.msra.mxu0 0.0
  %481 = vmatprep.subr.mxu0 0.0
  %482 = vmatpush1.msra.mxu0 0.0
  %483 = vmatprep.subr.mxu0 0.0
  %484 = vmatpush1.msra.mxu0 0.0
  %485 = vmatprep.subr.mxu0 0.0
  %486 = vmatpush1.msra.mxu0 0.0
  %487 = vmatprep.subr.mxu0 0.0
  %488 = vmatpush1.msra.mxu0 0.0
  %489 = vmatprep.subr.mxu0 0.0
  %490 = vmatpush1.msra.mxu0 0.0
  %491 = vmatprep.mubr.f32.mxu0 0.0
  %492 = vmatmul.mubr.f32.gmra.mrb[0].mxu0 %v25
  %v493 = vpop.f32.mrb[0].mxu0
  %v494 = vadd.f32 0.0, %v493
  %v495 = vpop.f32.mrb[0].mxu0
  %496 = vdwg.mxu0
  %s497 = scalar_lea.vmem [#allocation2], 40
  %498 = vst.msk [vmem:[%s497] sm:$0xff] %vm97, %v494
  %s499 = scalar_lea.vmem %s0, 336
  %v500 = vld [vmem:[%s499] sm:$0xff]
  %v501 = vld [vmem:[%s499 + $0x8] sm:$0xff]
  %v502 = vld [vmem:[%s499 + $0x10] sm:$0xff]
  %v503 = vld [vmem:[%s499 + $0x18] sm:$0xff]
  %v504 = vld [vmem:[%s499 + $0x20] sm:$0xff]
  %v505 = vld [vmem:[%s499 + $0x28] sm:$0xff]
  %v506 = vld [vmem:[%s499 + $0x30] sm:$0xff]
  %507 = vmatprep.subr.mxu0 0.0
  %508 = vmatpush1.msra.mxu0 %v500
  %509 = vmatprep.subr.mxu0 0.0
  %510 = vmatpush1.msra.mxu0 %v501
  %511 = vmatprep.subr.mxu0 0.0
  %512 = vmatpush1.msra.mxu0 %v502
  %513 = vmatprep.subr.mxu0 0.0
  %514 = vmatpush1.msra.mxu0 %v503
  %515 = vmatprep.subr.mxu0 0.0
  %516 = vmatpush1.msra.mxu0 %v504
  %517 = vmatprep.subr.mxu0 0.0
  %518 = vmatpush1.msra.mxu0 %v505
  %519 = vmatprep.subr.mxu0 0.0
  %520 = vmatpush1.msra.mxu0 %v506
  %521 = vmatprep.subr.mxu0 0.0
  %522 = vmatpush1.msra.mxu0 0.0
  %523 = vmatprep.subr.mxu0 0.0
  %524 = vmatpush1.msra.mxu0 0.0
  %525 = vmatprep.subr.mxu0 0.0
  %526 = vmatpush1.msra.mxu0 0.0
  %527 = vmatprep.subr.mxu0 0.0
  %528 = vmatpush1.msra.mxu0 0.0
  %529 = vmatprep.subr.mxu0 0.0
  %530 = vmatpush1.msra.mxu0 0.0
  %531 = vmatprep.subr.mxu0 0.0
  %532 = vmatpush1.msra.mxu0 0.0
  %533 = vmatprep.subr.mxu0 0.0
  %534 = vmatpush1.msra.mxu0 0.0
  %535 = vmatprep.subr.mxu0 0.0
  %536 = vmatpush1.msra.mxu0 0.0
  %537 = vmatprep.subr.mxu0 0.0
  %538 = vmatpush1.msra.mxu0 0.0
  %539 = vmatprep.subr.mxu0 0.0
  %540 = vmatpush1.msra.mxu0 0.0
  %541 = vmatprep.subr.mxu0 0.0
  %542 = vmatpush1.msra.mxu0 0.0
  %543 = vmatprep.subr.mxu0 0.0
  %544 = vmatpush1.msra.mxu0 0.0
  %545 = vmatprep.subr.mxu0 0.0
  %546 = vmatpush1.msra.mxu0 0.0
  %547 = vmatprep.subr.mxu0 0.0
  %548 = vmatpush1.msra.mxu0 0.0
  %549 = vmatprep.subr.mxu0 0.0
  %550 = vmatpush1.msra.mxu0 0.0
  %551 = vmatprep.subr.mxu0 0.0
  %552 = vmatpush1.msra.mxu0 0.0
  %553 = vmatprep.subr.mxu0 0.0
  %554 = vmatpush1.msra.mxu0 0.0
  %555 = vmatprep.subr.mxu0 0.0
  %556 = vmatpush1.msra.mxu0 0.0
  %557 = vmatprep.subr.mxu0 0.0
  %558 = vmatpush1.msra.mxu0 0.0
  %559 = vmatprep.subr.mxu0 0.0
  %560 = vmatpush1.msra.mxu0 0.0
  %561 = vmatprep.subr.mxu0 0.0
  %562 = vmatpush1.msra.mxu0 0.0
  %563 = vmatprep.subr.mxu0 0.0
  %564 = vmatpush1.msra.mxu0 0.0
  %565 = vmatprep.subr.mxu0 0.0
  %566 = vmatpush1.msra.mxu0 0.0
  %567 = vmatprep.subr.mxu0 0.0
  %568 = vmatpush1.msra.mxu0 0.0
  %569 = vmatprep.subr.mxu0 0.0
  %570 = vmatpush1.msra.mxu0 0.0
  %571 = vmatprep.mubr.f32.mxu0 0.0
  %572 = vmatmul.mubr.f32.gmra.mrb[0].mxu0 %v25
  %v573 = vpop.f32.mrb[0].mxu0
  %v574 = vadd.f32 0.0, %v573
  %v575 = vpop.f32.mrb[0].mxu0
  %576 = vdwg.mxu0
  %s577 = scalar_lea.vmem [#allocation2], 48
  %578 = vst.msk [vmem:[%s577] sm:$0xff] %vm97, %v574
  %s579 = scalar_lea.vmem %s0, 392
  %v580 = vld [vmem:[%s579] sm:$0xff]
  %v581 = vld [vmem:[%s579 + $0x8] sm:$0xff]
  %v582 = vld [vmem:[%s579 + $0x10] sm:$0xff]
  %v583 = vld [vmem:[%s579 + $0x18] sm:$0xff]
  %v584 = vld [vmem:[%s579 + $0x20] sm:$0xff]
  %v585 = vld [vmem:[%s579 + $0x28] sm:$0xff]
  %v586 = vld [vmem:[%s579 + $0x30] sm:$0xff]
  %587 = vmatprep.subr.mxu0 0.0
  %588 = vmatpush1.msra.mxu0 %v580
  %589 = vmatprep.subr.mxu0 0.0
  %590 = vmatpush1.msra.mxu0 %v581
  %591 = vmatprep.subr.mxu0 0.0
  %592 = vmatpush1.msra.mxu0 %v582
  %593 = vmatprep.subr.mxu0 0.0
  %594 = vmatpush1.msra.mxu0 %v583
  %595 = vmatprep.subr.mxu0 0.0
  %596 = vmatpush1.msra.mxu0 %v584
  %597 = vmatprep.subr.mxu0 0.0
  %598 = vmatpush1.msra.mxu0 %v585
  %599 = vmatprep.subr.mxu0 0.0
  %600 = vmatpush1.msra.mxu0 %v586
  %601 = vmatprep.subr.mxu0 0.0
  %602 = vmatpush1.msra.mxu0 0.0
  %603 = vmatprep.subr.mxu0 0.0
  %604 = vmatpush1.msra.mxu0 0.0
  %605 = vmatprep.subr.mxu0 0.0
  %606 = vmatpush1.msra.mxu0 0.0
  %607 = vmatprep.subr.mxu0 0.0
  %608 = vmatpush1.msra.mxu0 0.0
  %609 = vmatprep.subr.mxu0 0.0
  %610 = vmatpush1.msra.mxu0 0.0
  %611 = vmatprep.subr.mxu0 0.0
  %612 = vmatpush1.msra.mxu0 0.0
  %613 = vmatprep.subr.mxu0 0.0
  %614 = vmatpush1.msra.mxu0 0.0
  %615 = vmatprep.subr.mxu0 0.0
  %616 = vmatpush1.msra.mxu0 0.0
  %617 = vmatprep.subr.mxu0 0.0
  %618 = vmatpush1.msra.mxu0 0.0
  %619 = vmatprep.subr.mxu0 0.0
  %620 = vmatpush1.msra.mxu0 0.0
  %621 = vmatprep.subr.mxu0 0.0
  %622 = vmatpush1.msra.mxu0 0.0
  %623 = vmatprep.subr.mxu0 0.0
  %624 = vmatpush1.msra.mxu0 0.0
  %625 = vmatprep.subr.mxu0 0.0
  %626 = vmatpush1.msra.mxu0 0.0
  %627 = vmatprep.subr.mxu0 0.0
  %628 = vmatpush1.msra.mxu0 0.0
  %629 = vmatprep.subr.mxu0 0.0
  %630 = vmatpush1.msra.mxu0 0.0
  %631 = vmatprep.subr.mxu0 0.0
  %632 = vmatpush1.msra.mxu0 0.0
  %633 = vmatprep.subr.mxu0 0.0
  %634 = vmatpush1.msra.mxu0 0.0
  %635 = vmatprep.subr.mxu0 0.0
  %636 = vmatpush1.msra.mxu0 0.0
  %637 = vmatprep.subr.mxu0 0.0
  %638 = vmatpush1.msra.mxu0 0.0
  %639 = vmatprep.subr.mxu0 0.0
  %640 = vmatpush1.msra.mxu0 0.0
  %641 = vmatprep.subr.mxu0 0.0
  %642 = vmatpush1.msra.mxu0 0.0
  %643 = vmatprep.subr.mxu0 0.0
  %644 = vmatpush1.msra.mxu0 0.0
  %645 = vmatprep.subr.mxu0 0.0
  %646 = vmatpush1.msra.mxu0 0.0
  %647 = vmatprep.subr.mxu0 0.0
  %648 = vmatpush1.msra.mxu0 0.0
  %649 = vmatprep.subr.mxu0 0.0
  %650 = vmatpush1.msra.mxu0 0.0
  %651 = vmatprep.mubr.f32.mxu0 0.0
  %652 = vmatmul.mubr.f32.gmra.mrb[0].mxu0 %v25
  %v653 = vpop.f32.mrb[0].mxu0
  %v654 = vadd.f32 0.0, %v653
  %v655 = vpop.f32.mrb[0].mxu0
  %656 = vdwg.mxu0
  %s657 = scalar_lea.vmem [#allocation2], 56
  %658 = vst.msk [vmem:[%s657] sm:$0xff] %vm97, %v654
  %v659 = vld [vmem:[#allocation2] sm:$0xff]
  %vm660 = vcmask 64512
  %v662 = vsel %vm660, %v15, 0
  %664 = vmatprep.subr.mxu0 0.0
  %665 = vmatpush1.msra.mxu0 0.0
  %666 = vmatprep.subr.mxu0 0.0
  %667 = vmatpush1.msra.mxu0 0.0
  %668 = vmatprep.subr.mxu0 0.0
  %669 = vmatpush1.msra.mxu0 0.0
  %670 = vmatprep.subr.mxu0 0.0
  %671 = vmatpush1.msra.mxu0 0.0
  %672 = vmatprep.subr.mxu0 0.0
  %673 = vmatpush1.msra.mxu0 0.0
  %674 = vmatprep.subr.mxu0 0.0
  %675 = vmatpush1.msra.mxu0 0.0
  %676 = vmatprep.subr.mxu0 0.0
  %677 = vmatpush1.msra.mxu0 0.0
  %678 = vmatprep.subr.mxu0 0.0
  %679 = vmatpush1.msra.mxu0 0.0
  %680 = vmatprep.subr.mxu0 0.0
  %681 = vmatpush1.msra.mxu0 0.0
  %682 = vmatprep.subr.mxu0 0.0
  %683 = vmatpush1.msra.mxu0 0.0
  %684 = vmatprep.subr.mxu0 0.0
  %685 = vmatpush1.msra.mxu0 0.0
  %686 = vmatprep.subr.mxu0 0.0
  %687 = vmatpush1.msra.mxu0 0.0
  %688 = vmatprep.subr.mxu0 0.0
  %689 = vmatpush1.msra.mxu0 0.0
  %690 = vmatprep.subr.mxu0 0.0
  %691 = vmatpush1.msra.mxu0 0.0
  %692 = vmatprep.subr.mxu0 0.0
  %693 = vmatpush1.msra.mxu0 0.0
  %694 = vmatprep.subr.mxu0 0.0
  %695 = vmatpush1.msra.mxu0 0.0
  %696 = vmatprep.subr.mxu0 0.0
  %697 = vmatpush1.msra.mxu0 0.0
  %698 = vmatprep.subr.mxu0 0.0
  %699 = vmatpush1.msra.mxu0 0.0
  %700 = vmatprep.subr.mxu0 0.0
  %701 = vmatpush1.msra.mxu0 0.0
  %702 = vmatprep.subr.mxu0 0.0
  %703 = vmatpush1.msra.mxu0 0.0
  %704 = vmatprep.subr.mxu0 0.0
  %705 = vmatpush1.msra.mxu0 0.0
  %706 = vmatprep.subr.mxu0 0.0
  %707 = vmatpush1.msra.mxu0 0.0
  %708 = vmatprep.subr.mxu0 0.0
  %709 = vmatpush1.msra.mxu0 0.0
  %710 = vmatprep.subr.mxu0 0.0
  %711 = vmatpush1.msra.mxu0 0.0
  %712 = vmatprep.subr.mxu0 0.0
  %713 = vmatpush1.msra.mxu0 0.0
  %714 = vmatprep.subr.mxu0 0.0
  %715 = vmatpush1.msra.mxu0 0.0
  %716 = vmatprep.subr.mxu0 0.0
  %717 = vmatpush1.msra.mxu0 0.0
  %718 = vmatprep.subr.mxu0 0.0
  %719 = vmatpush1.msra.mxu0 0.0
  %720 = vmatprep.subr.mxu0 0.0
  %721 = vmatpush1.msra.mxu0 0.0
  %722 = vmatprep.subr.mxu0 0.0
  %723 = vmatpush1.msra.mxu0 0.0
  %724 = vmatprep.subr.mxu0 0.0
  %725 = vmatpush1.msra.mxu0 0.0
  %726 = vmatprep.subr.mxu0 0.0
  %727 = vmatpush1.msra.mxu0 0.0
  %728 = vmatprep.mubr.f32.mxu0 0.0
  %729 = vmatmul.mubr.f32.gmra.mrb[0].mxu0 %v662
  %v730 = vpop.f32.mrb[0].mxu0
  %v731 = vadd.f32 0.0, %v730
  %v732 = vpop.f32.mrb[0].mxu0
  %733 = vdwg.mxu0
  %v734 = vadd.f32 %v659, %v731
  %v735 = vtanh.pop %v734
  %v736 = vmul.f32 %v735, 10.0
  %737 = vst.msk [vmem:[%s3] sm:$0xff] %vm97, %v736
  %v738 = vld [vmem:[%s177] sm:$0xff]
  %739 = vmatprep.subr.mxu0 0.0
  %740 = vmatpush1.msra.mxu0 %v735
  %741 = vmatprep.subr.mxu0 0.0
  %742 = vmatpush1.msra.mxu0 0.0
  %743 = vmatprep.subr.mxu0 0.0
  %744 = vmatpush1.msra.mxu0 0.0
  %745 = vmatprep.subr.mxu0 0.0
  %746 = vmatpush1.msra.mxu0 0.0
  %747 = vmatprep.subr.mxu0 0.0
  %748 = vmatpush1.msra.mxu0 0.0
  %749 = vmatprep.subr.mxu0 0.0
  %750 = vmatpush1.msra.mxu0 0.0
  %751 = vmatprep.subr.mxu0 0.0
  %752 = vmatpush1.msra.mxu0 0.0
  %753 = vmatprep.subr.mxu0 0.0
  %754 = vmatpush1.msra.mxu0 0.0
  %755 = vmatprep.subr.mxu0 0.0
  %756 = vmatpush1.msra.mxu0 0.0
  %757 = vmatprep.subr.mxu0 0.0
  %758 = vmatpush1.msra.mxu0 0.0
  %759 = vmatprep.subr.mxu0 0.0
  %760 = vmatpush1.msra.mxu0 0.0
  %761 = vmatprep.subr.mxu0 0.0
  %762 = vmatpush1.msra.mxu0 0.0
  %763 = vmatprep.subr.mxu0 0.0
  %764 = vmatpush1.msra.mxu0 0.0
  %765 = vmatprep.subr.mxu0 0.0
  %766 = vmatpush1.msra.mxu0 0.0
  %767 = vmatprep.subr.mxu0 0.0
  %768 = vmatpush1.msra.mxu0 0.0
  %769 = vmatprep.subr.mxu0 0.0
  %770 = vmatpush1.msra.mxu0 0.0
  %771 = vmatprep.subr.mxu0 0.0
  %772 = vmatpush1.msra.mxu0 0.0
  %773 = vmatprep.subr.mxu0 0.0
  %774 = vmatpush1.msra.mxu0 0.0
  %775 = vmatprep.subr.mxu0 0.0
  %776 = vmatpush1.msra.mxu0 0.0
  %777 = vmatprep.subr.mxu0 0.0
  %778 = vmatpush1.msra.mxu0 0.0
  %779 = vmatprep.subr.mxu0 0.0
  %780 = vmatpush1.msra.mxu0 0.0
  %781 = vmatprep.subr.mxu0 0.0
  %782 = vmatpush1.msra.mxu0 0.0
  %783 = vmatprep.subr.mxu0 0.0
  %784 = vmatpush1.msra.mxu0 0.0
  %785 = vmatprep.subr.mxu0 0.0
  %786 = vmatpush1.msra.mxu0 0.0
  %787 = vmatprep.subr.mxu0 0.0
  %788 = vmatpush1.msra.mxu0 0.0
  %789 = vmatprep.subr.mxu0 0.0
  %790 = vmatpush1.msra.mxu0 0.0
  %791 = vmatprep.subr.mxu0 0.0
  %792 = vmatpush1.msra.mxu0 0.0
  %793 = vmatprep.subr.mxu0 0.0
  %794 = vmatpush1.msra.mxu0 0.0
  %795 = vmatprep.subr.mxu0 0.0
  %796 = vmatpush1.msra.mxu0 0.0
  %797 = vmatprep.subr.mxu0 0.0
  %798 = vmatpush1.msra.mxu0 0.0
  %799 = vmatprep.subr.mxu0 0.0
  %800 = vmatpush1.msra.mxu0 0.0
  %801 = vmatprep.subr.mxu0 0.0
  %802 = vmatpush1.msra.mxu0 0.0
  %803 = vmatprep.mubr.f32.mxu0 0.0
  %804 = vmatmul.mubr.f32.gmra.mrb[0].mxu0 %v662
  %v805 = vpop.f32.mrb[0].mxu0
  %v806 = vadd.f32 0.0, %v805
  %v807 = vpop.f32.mrb[0].mxu0
  %808 = vdwg.mxu0
  %v809 = vadd.f32 %v738, %v806
  %v810 = vtanh.pop %v809
  %v811 = vmul.f32 %v810, 10.0
  %s812 = scalar_lea.vmem %s3, 8
  %813 = vst.msk [vmem:[%s812] sm:$0xff] %vm97, %v811
  %v814 = vld [vmem:[%s257] sm:$0xff]
  %815 = vmatprep.subr.mxu0 0.0
  %816 = vmatpush1.msra.mxu0 %v810
  %817 = vmatprep.subr.mxu0 0.0
  %818 = vmatpush1.msra.mxu0 0.0
  %819 = vmatprep.subr.mxu0 0.0
  %820 = vmatpush1.msra.mxu0 0.0
  %821 = vmatprep.subr.mxu0 0.0
  %822 = vmatpush1.msra.mxu0 0.0
  %823 = vmatprep.subr.mxu0 0.0
  %824 = vmatpush1.msra.mxu0 0.0
  %825 = vmatprep.subr.mxu0 0.0
  %826 = vmatpush1.msra.mxu0 0.0
  %827 = vmatprep.subr.mxu0 0.0
  %828 = vmatpush1.msra.mxu0 0.0
  %829 = vmatprep.subr.mxu0 0.0
  %830 = vmatpush1.msra.mxu0 0.0
  %831 = vmatprep.subr.mxu0 0.0
  %832 = vmatpush1.msra.mxu0 0.0
  %833 = vmatprep.subr.mxu0 0.0
  %834 = vmatpush1.msra.mxu0 0.0
  %835 = vmatprep.subr.mxu0 0.0
  %836 = vmatpush1.msra.mxu0 0.0
  %837 = vmatprep.subr.mxu0 0.0
  %838 = vmatpush1.msra.mxu0 0.0
  %839 = vmatprep.subr.mxu0 0.0
  %840 = vmatpush1.msra.mxu0 0.0
  %841 = vmatprep.subr.mxu0 0.0
  %842 = vmatpush1.msra.mxu0 0.0
  %843 = vmatprep.subr.mxu0 0.0
  %844 = vmatpush1.msra.mxu0 0.0
  %845 = vmatprep.subr.mxu0 0.0
  %846 = vmatpush1.msra.mxu0 0.0
  %847 = vmatprep.subr.mxu0 0.0
  %848 = vmatpush1.msra.mxu0 0.0
  %849 = vmatprep.subr.mxu0 0.0
  %850 = vmatpush1.msra.mxu0 0.0
  %851 = vmatprep.subr.mxu0 0.0
  %852 = vmatpush1.msra.mxu0 0.0
  %853 = vmatprep.subr.mxu0 0.0
  %854 = vmatpush1.msra.mxu0 0.0
  %855 = vmatprep.subr.mxu0 0.0
  %856 = vmatpush1.msra.mxu0 0.0
  %857 = vmatprep.subr.mxu0 0.0
  %858 = vmatpush1.msra.mxu0 0.0
  %859 = vmatprep.subr.mxu0 0.0
  %860 = vmatpush1.msra.mxu0 0.0
  %861 = vmatprep.subr.mxu0 0.0
  %862 = vmatpush1.msra.mxu0 0.0
  %863 = vmatprep.subr.mxu0 0.0
  %864 = vmatpush1.msra.mxu0 0.0
  %865 = vmatprep.subr.mxu0 0.0
  %866 = vmatpush1.msra.mxu0 0.0
  %867 = vmatprep.subr.mxu0 0.0
  %868 = vmatpush1.msra.mxu0 0.0
  %869 = vmatprep.subr.mxu0 0.0
  %870 = vmatpush1.msra.mxu0 0.0
  %871 = vmatprep.subr.mxu0 0.0
  %872 = vmatpush1.msra.mxu0 0.0
  %873 = vmatprep.subr.mxu0 0.0
  %874 = vmatpush1.msra.mxu0 0.0
  %875 = vmatprep.subr.mxu0 0.0
  %876 = vmatpush1.msra.mxu0 0.0
  %877 = vmatprep.subr.mxu0 0.0
  %878 = vmatpush1.msra.mxu0 0.0
  %879 = vmatprep.mubr.f32.mxu0 0.0
  %880 = vmatmul.mubr.f32.gmra.mrb[0].mxu0 %v662
  %v881 = vpop.f32.mrb[0].mxu0
  %v882 = vadd.f32 0.0, %v881
  %v883 = vpop.f32.mrb[0].mxu0
  %884 = vdwg.mxu0
  %v885 = vadd.f32 %v814, %v882
  %v886 = vtanh.pop %v885
  %v887 = vmul.f32 %v886, 10.0
  %s888 = scalar_lea.vmem %s3, 16
  %889 = vst.msk [vmem:[%s888] sm:$0xff] %vm97, %v887
  %v890 = vld [vmem:[%s337] sm:$0xff]
  %891 = vmatprep.subr.mxu0 0.0
  %892 = vmatpush1.msra.mxu0 %v886
  %893 = vmatprep.subr.mxu0 0.0
  %894 = vmatpush1.msra.mxu0 0.0
  %895 = vmatprep.subr.mxu0 0.0
  %896 = vmatpush1.msra.mxu0 0.0
  %897 = vmatprep.subr.mxu0 0.0
  %898 = vmatpush1.msra.mxu0 0.0
  %899 = vmatprep.subr.mxu0 0.0
  %900 = vmatpush1.msra.mxu0 0.0
  %901 = vmatprep.subr.mxu0 0.0
  %902 = vmatpush1.msra.mxu0 0.0
  %903 = vmatprep.subr.mxu0 0.0
  %904 = vmatpush1.msra.mxu0 0.0
  %905 = vmatprep.subr.mxu0 0.0
  %906 = vmatpush1.msra.mxu0 0.0
  %907 = vmatprep.subr.mxu0 0.0
  %908 = vmatpush1.msra.mxu0 0.0
  %909 = vmatprep.subr.mxu0 0.0
  %910 = vmatpush1.msra.mxu0 0.0
  %911 = vmatprep.subr.mxu0 0.0
  %912 = vmatpush1.msra.mxu0 0.0
  %913 = vmatprep.subr.mxu0 0.0
  %914 = vmatpush1.msra.mxu0 0.0
  %915 = vmatprep.subr.mxu0 0.0
  %916 = vmatpush1.msra.mxu0 0.0
  %917 = vmatprep.subr.mxu0 0.0
  %918 = vmatpush1.msra.mxu0 0.0
  %919 = vmatprep.subr.mxu0 0.0
  %920 = vmatpush1.msra.mxu0 0.0
  %921 = vmatprep.subr.mxu0 0.0
  %922 = vmatpush1.msra.mxu0 0.0
  %923 = vmatprep.subr.mxu0 0.0
  %924 = vmatpush1.msra.mxu0 0.0
  %925 = vmatprep.subr.mxu0 0.0
  %926 = vmatpush1.msra.mxu0 0.0
  %927 = vmatprep.subr.mxu0 0.0
  %928 = vmatpush1.msra.mxu0 0.0
  %929 = vmatprep.subr.mxu0 0.0
  %930 = vmatpush1.msra.mxu0 0.0
  %931 = vmatprep.subr.mxu0 0.0
  %932 = vmatpush1.msra.mxu0 0.0
  %933 = vmatprep.subr.mxu0 0.0
  %934 = vmatpush1.msra.mxu0 0.0
  %935 = vmatprep.subr.mxu0 0.0
  %936 = vmatpush1.msra.mxu0 0.0
  %937 = vmatprep.subr.mxu0 0.0
  %938 = vmatpush1.msra.mxu0 0.0
  %939 = vmatprep.subr.mxu0 0.0
  %940 = vmatpush1.msra.mxu0 0.0
  %941 = vmatprep.subr.mxu0 0.0
  %942 = vmatpush1.msra.mxu0 0.0
  %943 = vmatprep.subr.mxu0 0.0
  %944 = vmatpush1.msra.mxu0 0.0
  %945 = vmatprep.subr.mxu0 0.0
  %946 = vmatpush1.msra.mxu0 0.0
  %947 = vmatprep.subr.mxu0 0.0
  %948 = vmatpush1.msra.mxu0 0.0
  %949 = vmatprep.subr.mxu0 0.0
  %950 = vmatpush1.msra.mxu0 0.0
  %951 = vmatprep.subr.mxu0 0.0
  %952 = vmatpush1.msra.mxu0 0.0
  %953 = vmatprep.subr.mxu0 0.0
  %954 = vmatpush1.msra.mxu0 0.0
  %955 = vmatprep.mubr.f32.mxu0 0.0
  %956 = vmatmul.mubr.f32.gmra.mrb[0].mxu0 %v662
  %v957 = vpop.f32.mrb[0].mxu0
  %v958 = vadd.f32 0.0, %v957
  %v959 = vpop.f32.mrb[0].mxu0
  %960 = vdwg.mxu0
  %v961 = vadd.f32 %v890, %v958
  %v962 = vtanh.pop %v961
  %v963 = vmul.f32 %v962, 10.0
  %s964 = scalar_lea.vmem %s3, 24
  %965 = vst.msk [vmem:[%s964] sm:$0xff] %vm97, %v963
  %v966 = vld [vmem:[%s417] sm:$0xff]
  %967 = vmatprep.subr.mxu0 0.0
  %968 = vmatpush1.msra.mxu0 %v962
  %969 = vmatprep.subr.mxu0 0.0
  %970 = vmatpush1.msra.mxu0 0.0
  %971 = vmatprep.subr.mxu0 0.0
  %972 = vmatpush1.msra.mxu0 0.0
  %973 = vmatprep.subr.mxu0 0.0
  %974 = vmatpush1.msra.mxu0 0.0
  %975 = vmatprep.subr.mxu0 0.0
  %976 = vmatpush1.msra.mxu0 0.0
  %977 = vmatprep.subr.mxu0 0.0
  %978 = vmatpush1.msra.mxu0 0.0
  %979 = vmatprep.subr.mxu0 0.0
  %980 = vmatpush1.msra.mxu0 0.0
  %981 = vmatprep.subr.mxu0 0.0
  %982 = vmatpush1.msra.mxu0 0.0
  %983 = vmatprep.subr.mxu0 0.0
  %984 = vmatpush1.msra.mxu0 0.0
  %985 = vmatprep.subr.mxu0 0.0
  %986 = vmatpush1.msra.mxu0 0.0
  %987 = vmatprep.subr.mxu0 0.0
  %988 = vmatpush1.msra.mxu0 0.0
  %989 = vmatprep.subr.mxu0 0.0
  %990 = vmatpush1.msra.mxu0 0.0
  %991 = vmatprep.subr.mxu0 0.0
  %992 = vmatpush1.msra.mxu0 0.0
  %993 = vmatprep.subr.mxu0 0.0
  %994 = vmatpush1.msra.mxu0 0.0
  %995 = vmatprep.subr.mxu0 0.0
  %996 = vmatpush1.msra.mxu0 0.0
  %997 = vmatprep.subr.mxu0 0.0
  %998 = vmatpush1.msra.mxu0 0.0
  %999 = vmatprep.subr.mxu0 0.0
  %1000 = vmatpush1.msra.mxu0 0.0
  %1001 = vmatprep.subr.mxu0 0.0
  %1002 = vmatpush1.msra.mxu0 0.0
  %1003 = vmatprep.subr.mxu0 0.0
  %1004 = vmatpush1.msra.mxu0 0.0
  %1005 = vmatprep.subr.mxu0 0.0
  %1006 = vmatpush1.msra.mxu0 0.0
  %1007 = vmatprep.subr.mxu0 0.0
  %1008 = vmatpush1.msra.mxu0 0.0
  %1009 = vmatprep.subr.mxu0 0.0
  %1010 = vmatpush1.msra.mxu0 0.0
  %1011 = vmatprep.subr.mxu0 0.0
  %1012 = vmatpush1.msra.mxu0 0.0
  %1013 = vmatprep.subr.mxu0 0.0
  %1014 = vmatpush1.msra.mxu0 0.0
  %1015 = vmatprep.subr.mxu0 0.0
  %1016 = vmatpush1.msra.mxu0 0.0
  %1017 = vmatprep.subr.mxu0 0.0
  %1018 = vmatpush1.msra.mxu0 0.0
  %1019 = vmatprep.subr.mxu0 0.0
  %1020 = vmatpush1.msra.mxu0 0.0
  %1021 = vmatprep.subr.mxu0 0.0
  %1022 = vmatpush1.msra.mxu0 0.0
  %1023 = vmatprep.subr.mxu0 0.0
  %1024 = vmatpush1.msra.mxu0 0.0
  %1025 = vmatprep.subr.mxu0 0.0
  %1026 = vmatpush1.msra.mxu0 0.0
  %1027 = vmatprep.subr.mxu0 0.0
  %1028 = vmatpush1.msra.mxu0 0.0
  %1029 = vmatprep.subr.mxu0 0.0
  %1030 = vmatpush1.msra.mxu0 0.0
  %1031 = vmatprep.mubr.f32.mxu0 0.0
  %1032 = vmatmul.mubr.f32.gmra.mrb[0].mxu0 %v662
  %v1033 = vpop.f32.mrb[0].mxu0
  %v1034 = vadd.f32 0.0, %v1033
  %v1035 = vpop.f32.mrb[0].mxu0
  %1036 = vdwg.mxu0
  %v1037 = vadd.f32 %v966, %v1034
  %v1038 = vtanh.pop %v1037
  %v1039 = vmul.f32 %v1038, 10.0
  %s1040 = scalar_lea.vmem %s3, 32
  %1041 = vst.msk [vmem:[%s1040] sm:$0xff] %vm97, %v1039
  %v1042 = vld [vmem:[%s497] sm:$0xff]
  %1043 = vmatprep.subr.mxu0 0.0
  %1044 = vmatpush1.msra.mxu0 %v1038
  %1045 = vmatprep.subr.mxu0 0.0
  %1046 = vmatpush1.msra.mxu0 0.0
  %1047 = vmatprep.subr.mxu0 0.0
  %1048 = vmatpush1.msra.mxu0 0.0
  %1049 = vmatprep.subr.mxu0 0.0
  %1050 = vmatpush1.msra.mxu0 0.0
  %1051 = vmatprep.subr.mxu0 0.0
  %1052 = vmatpush1.msra.mxu0 0.0
  %1053 = vmatprep.subr.mxu0 0.0
  %1054 = vmatpush1.msra.mxu0 0.0
  %1055 = vmatprep.subr.mxu0 0.0
  %1056 = vmatpush1.msra.mxu0 0.0
  %1057 = vmatprep.subr.mxu0 0.0
  %1058 = vmatpush1.msra.mxu0 0.0
  %1059 = vmatprep.subr.mxu0 0.0
  %1060 = vmatpush1.msra.mxu0 0.0
  %1061 = vmatprep.subr.mxu0 0.0
  %1062 = vmatpush1.msra.mxu0 0.0
  %1063 = vmatprep.subr.mxu0 0.0
  %1064 = vmatpush1.msra.mxu0 0.0
  %1065 = vmatprep.subr.mxu0 0.0
  %1066 = vmatpush1.msra.mxu0 0.0
  %1067 = vmatprep.subr.mxu0 0.0
  %1068 = vmatpush1.msra.mxu0 0.0
  %1069 = vmatprep.subr.mxu0 0.0
  %1070 = vmatpush1.msra.mxu0 0.0
  %1071 = vmatprep.subr.mxu0 0.0
  %1072 = vmatpush1.msra.mxu0 0.0
  %1073 = vmatprep.subr.mxu0 0.0
  %1074 = vmatpush1.msra.mxu0 0.0
  %1075 = vmatprep.subr.mxu0 0.0
  %1076 = vmatpush1.msra.mxu0 0.0
  %1077 = vmatprep.subr.mxu0 0.0
  %1078 = vmatpush1.msra.mxu0 0.0
  %1079 = vmatprep.subr.mxu0 0.0
  %1080 = vmatpush1.msra.mxu0 0.0
  %1081 = vmatprep.subr.mxu0 0.0
  %1082 = vmatpush1.msra.mxu0 0.0
  %1083 = vmatprep.subr.mxu0 0.0
  %1084 = vmatpush1.msra.mxu0 0.0
  %1085 = vmatprep.subr.mxu0 0.0
  %1086 = vmatpush1.msra.mxu0 0.0
  %1087 = vmatprep.subr.mxu0 0.0
  %1088 = vmatpush1.msra.mxu0 0.0
  %1089 = vmatprep.subr.mxu0 0.0
  %1090 = vmatpush1.msra.mxu0 0.0
  %1091 = vmatprep.subr.mxu0 0.0
  %1092 = vmatpush1.msra.mxu0 0.0
  %1093 = vmatprep.subr.mxu0 0.0
  %1094 = vmatpush1.msra.mxu0 0.0
  %1095 = vmatprep.subr.mxu0 0.0
  %1096 = vmatpush1.msra.mxu0 0.0
  %1097 = vmatprep.subr.mxu0 0.0
  %1098 = vmatpush1.msra.mxu0 0.0
  %1099 = vmatprep.subr.mxu0 0.0
  %1100 = vmatpush1.msra.mxu0 0.0
  %1101 = vmatprep.subr.mxu0 0.0
  %1102 = vmatpush1.msra.mxu0 0.0
  %1103 = vmatprep.subr.mxu0 0.0
  %1104 = vmatpush1.msra.mxu0 0.0
  %1105 = vmatprep.subr.mxu0 0.0
  %1106 = vmatpush1.msra.mxu0 0.0
  %1107 = vmatprep.mubr.f32.mxu0 0.0
  %1108 = vmatmul.mubr.f32.gmra.mrb[0].mxu0 %v662
  %v1109 = vpop.f32.mrb[0].mxu0
  %v1110 = vadd.f32 0.0, %v1109
  %v1111 = vpop.f32.mrb[0].mxu0
  %1112 = vdwg.mxu0
  %v1113 = vadd.f32 %v1042, %v1110
  %v1114 = vtanh.pop %v1113
  %v1115 = vmul.f32 %v1114, 10.0
  %s1116 = scalar_lea.vmem %s3, 40
  %1117 = vst.msk [vmem:[%s1116] sm:$0xff] %vm97, %v1115
  %v1118 = vld [vmem:[%s577] sm:$0xff]
  %1119 = vmatprep.subr.mxu0 0.0
  %1120 = vmatpush1.msra.mxu0 %v1114
  %1121 = vmatprep.subr.mxu0 0.0
  %1122 = vmatpush1.msra.mxu0 0.0
  %1123 = vmatprep.subr.mxu0 0.0
  %1124 = vmatpush1.msra.mxu0 0.0
  %1125 = vmatprep.subr.mxu0 0.0
  %1126 = vmatpush1.msra.mxu0 0.0
  %1127 = vmatprep.subr.mxu0 0.0
  %1128 = vmatpush1.msra.mxu0 0.0
  %1129 = vmatprep.subr.mxu0 0.0
  %1130 = vmatpush1.msra.mxu0 0.0
  %1131 = vmatprep.subr.mxu0 0.0
  %1132 = vmatpush1.msra.mxu0 0.0
  %1133 = vmatprep.subr.mxu0 0.0
  %1134 = vmatpush1.msra.mxu0 0.0
  %1135 = vmatprep.subr.mxu0 0.0
  %1136 = vmatpush1.msra.mxu0 0.0
  %1137 = vmatprep.subr.mxu0 0.0
  %1138 = vmatpush1.msra.mxu0 0.0
  %1139 = vmatprep.subr.mxu0 0.0
  %1140 = vmatpush1.msra.mxu0 0.0
  %1141 = vmatprep.subr.mxu0 0.0
  %1142 = vmatpush1.msra.mxu0 0.0
  %1143 = vmatprep.subr.mxu0 0.0
  %1144 = vmatpush1.msra.mxu0 0.0
  %1145 = vmatprep.subr.mxu0 0.0
  %1146 = vmatpush1.msra.mxu0 0.0
  %1147 = vmatprep.subr.mxu0 0.0
  %1148 = vmatpush1.msra.mxu0 0.0
  %1149 = vmatprep.subr.mxu0 0.0
  %1150 = vmatpush1.msra.mxu0 0.0
  %1151 = vmatprep.subr.mxu0 0.0
  %1152 = vmatpush1.msra.mxu0 0.0
  %1153 = vmatprep.subr.mxu0 0.0
  %1154 = vmatpush1.msra.mxu0 0.0
  %1155 = vmatprep.subr.mxu0 0.0
  %1156 = vmatpush1.msra.mxu0 0.0
  %1157 = vmatprep.subr.mxu0 0.0
  %1158 = vmatpush1.msra.mxu0 0.0
  %1159 = vmatprep.subr.mxu0 0.0
  %1160 = vmatpush1.msra.mxu0 0.0
  %1161 = vmatprep.subr.mxu0 0.0
  %1162 = vmatpush1.msra.mxu0 0.0
  %1163 = vmatprep.subr.mxu0 0.0
  %1164 = vmatpush1.msra.mxu0 0.0
  %1165 = vmatprep.subr.mxu0 0.0
  %1166 = vmatpush1.msra.mxu0 0.0
  %1167 = vmatprep.subr.mxu0 0.0
  %1168 = vmatpush1.msra.mxu0 0.0
  %1169 = vmatprep.subr.mxu0 0.0
  %1170 = vmatpush1.msra.mxu0 0.0
  %1171 = vmatprep.subr.mxu0 0.0
  %1172 = vmatpush1.msra.mxu0 0.0
  %1173 = vmatprep.subr.mxu0 0.0
  %1174 = vmatpush1.msra.mxu0 0.0
  %1175 = vmatprep.subr.mxu0 0.0
  %1176 = vmatpush1.msra.mxu0 0.0
  %1177 = vmatprep.subr.mxu0 0.0
  %1178 = vmatpush1.msra.mxu0 0.0
  %1179 = vmatprep.subr.mxu0 0.0
  %1180 = vmatpush1.msra.mxu0 0.0
  %1181 = vmatprep.subr.mxu0 0.0
  %1182 = vmatpush1.msra.mxu0 0.0
  %1183 = vmatprep.mubr.f32.mxu0 0.0
  %1184 = vmatmul.mubr.f32.gmra.mrb[0].mxu0 %v662
  %v1185 = vpop.f32.mrb[0].mxu0
  %v1186 = vadd.f32 0.0, %v1185
  %v1187 = vpop.f32.mrb[0].mxu0
  %1188 = vdwg.mxu0
  %v1189 = vadd.f32 %v1118, %v1186
  %v1190 = vtanh.pop %v1189
  %v1191 = vmul.f32 %v1190, 10.0
  %s1192 = scalar_lea.vmem %s3, 48
  %1193 = vst.msk [vmem:[%s1192] sm:$0xff] %vm97, %v1191
  %v1194 = vld [vmem:[%s657] sm:$0xff]
  %1195 = vmatprep.subr.mxu0 0.0
  %1196 = vmatpush1.msra.mxu0 %v1190
  %1197 = vmatprep.subr.mxu0 0.0
  %1198 = vmatpush1.msra.mxu0 0.0
  %1199 = vmatprep.subr.mxu0 0.0
  %1200 = vmatpush1.msra.mxu0 0.0
  %1201 = vmatprep.subr.mxu0 0.0
  %1202 = vmatpush1.msra.mxu0 0.0
  %1203 = vmatprep.subr.mxu0 0.0
  %1204 = vmatpush1.msra.mxu0 0.0
  %1205 = vmatprep.subr.mxu0 0.0
  %1206 = vmatpush1.msra.mxu0 0.0
  %1207 = vmatprep.subr.mxu0 0.0
  %1208 = vmatpush1.msra.mxu0 0.0
  %1209 = vmatprep.subr.mxu0 0.0
  %1210 = vmatpush1.msra.mxu0 0.0
  %1211 = vmatprep.subr.mxu0 0.0
  %1212 = vmatpush1.msra.mxu0 0.0
  %1213 = vmatprep.subr.mxu0 0.0
  %1214 = vmatpush1.msra.mxu0 0.0
  %1215 = vmatprep.subr.mxu0 0.0
  %1216 = vmatpush1.msra.mxu0 0.0
  %1217 = vmatprep.subr.mxu0 0.0
  %1218 = vmatpush1.msra.mxu0 0.0
  %1219 = vmatprep.subr.mxu0 0.0
  %1220 = vmatpush1.msra.mxu0 0.0
  %1221 = vmatprep.subr.mxu0 0.0
  %1222 = vmatpush1.msra.mxu0 0.0
  %1223 = vmatprep.subr.mxu0 0.0
  %1224 = vmatpush1.msra.mxu0 0.0
  %1225 = vmatprep.subr.mxu0 0.0
  %1226 = vmatpush1.msra.mxu0 0.0
  %1227 = vmatprep.subr.mxu0 0.0
  %1228 = vmatpush1.msra.mxu0 0.0
  %1229 = vmatprep.subr.mxu0 0.0
  %1230 = vmatpush1.msra.mxu0 0.0
  %1231 = vmatprep.subr.mxu0 0.0
  %1232 = vmatpush1.msra.mxu0 0.0
  %1233 = vmatprep.subr.mxu0 0.0
  %1234 = vmatpush1.msra.mxu0 0.0
  %1235 = vmatprep.subr.mxu0 0.0
  %1236 = vmatpush1.msra.mxu0 0.0
  %1237 = vmatprep.subr.mxu0 0.0
  %1238 = vmatpush1.msra.mxu0 0.0
  %1239 = vmatprep.subr.mxu0 0.0
  %1240 = vmatpush1.msra.mxu0 0.0
  %1241 = vmatprep.subr.mxu0 0.0
  %1242 = vmatpush1.msra.mxu0 0.0
  %1243 = vmatprep.subr.mxu0 0.0
  %1244 = vmatpush1.msra.mxu0 0.0
  %1245 = vmatprep.subr.mxu0 0.0
  %1246 = vmatpush1.msra.mxu0 0.0
  %1247 = vmatprep.subr.mxu0 0.0
  %1248 = vmatpush1.msra.mxu0 0.0
  %1249 = vmatprep.subr.mxu0 0.0
  %1250 = vmatpush1.msra.mxu0 0.0
  %1251 = vmatprep.subr.mxu0 0.0
  %1252 = vmatpush1.msra.mxu0 0.0
  %1253 = vmatprep.subr.mxu0 0.0
  %1254 = vmatpush1.msra.mxu0 0.0
  %1255 = vmatprep.subr.mxu0 0.0
  %1256 = vmatpush1.msra.mxu0 0.0
  %1257 = vmatprep.subr.mxu0 0.0
  %1258 = vmatpush1.msra.mxu0 0.0
  %1259 = vmatprep.mubr.f32.mxu0 0.0
  %1260 = vmatmul.mubr.f32.gmra.mrb[0].mxu0 %v662
  %v1261 = vpop.f32.mrb[0].mxu0
  %v1262 = vadd.f32 0.0, %v1261
  %v1263 = vpop.f32.mrb[0].mxu0
  %1264 = vdwg.mxu0
  %v1265 = vadd.f32 %v1194, %v1262
  %v1266 = vtanh.pop %v1265
  %v1267 = vmul.f32 %v1266, 10.0
  %s1268 = scalar_lea.vmem %s3, 56
  %1269 = vst.msk [vmem:[%s1268] sm:$0xff] %vm97, %v1267
  // Predicated region
  $region14: #{tpu_custom_call.1} parent=0 // pred_check
    _
  $region15: #{tpu_custom_call.1} parent=0 // pred_check_branch
    %1271 = sbr.rel (0) target = $region17
  $region16: #{tpu_custom_call.1} parent=0 // pred_region
    _
  $region17: #{tpu_custom_call.1} parent=0 // pred_fallthru
    _
  // Predicated region
  $region18: #{tpu_custom_call.1} parent=0 // pred_check
    _
  $region19: #{tpu_custom_call.1} parent=0 // pred_check_branch
    %1273 = sbr.rel (0) target = $region21
  $region20: #{tpu_custom_call.1} parent=0 // pred_region
    _
  $region21: #{tpu_custom_call.1} parent=0 // pred_fallthru
    _

</llo_original>
